<compile_context>
chip_gen: v6e
topology: v6e:2x2x1
jax: 0.10.0
libtpu: 0.0.40
codegen_flags: <defaults>
</compile_context>

<pallas_src>
import jax
import jax.numpy as jnp
from jax.experimental import pallas as pl
from jax.experimental.pallas import tpu as pltpu

STATE_DIM = 8      # state[idx].reshape(1, 8) in the torch code
HIDDEN = 32        # args.hidden_size
N_ACT = 4          # LunarLander-style discrete action space
NENV = 8           # args.nenv
N_STEP = 8         # args.n_step (rollout length hoisted into the kernel)

STEP_W = 16        # per-step input slab width: state(8) | 1.0 | gumbel(4) | pad(3)
OUT_W = 128        # lane-dense output slab width
COL_ACT = HIDDEN
COL_LOGP = HIDDEN + 1
COL_VAL = HIDDEN + 2
COL_ENT = HIDDEN + 3


def a2c_rollout_kernel(step_ref, h0_ref, w_in16_ref, w_i4_ref, w_h4_ref,
                       b_g4_ref, w_heads_ref, b_heads_ref, out_ref,
                       g_in_scr, h_all_scr):
    H = HIDDEN
    TN = step_ref.shape[0]          # T * NENV (static)
    T = TN // NENV

    # ---- Batched, time-independent pre-work (one big MXU pass) -------------
    x_all = step_ref[...]                                        # (TN, STEP_W)
    # Feature extractor Linear(8->H)+ReLU; bias folded via the ones column,
    # gumbel/pad columns hit zero rows of w_in16.
    feat_all = jnp.maximum(
        jnp.dot(x_all, w_in16_ref[...], preferred_element_type=jnp.float32),
        0.0)                                                     # (TN, H)
    # GRU input projection for all steps, gates laid out as [r | z | i_n | h_n].
    g_in_scr[...] = (
        jnp.dot(feat_all, w_i4_ref[...], preferred_element_type=jnp.float32)
        + b_g4_ref[...])                                         # (TN, 4H)

    w_h4 = w_h4_ref[...]                                         # (H, 4H)

    # ---- Serial GRU recurrence: only the h-dependent matmul + gates --------
    def gru_step(t, h):
        row = pl.multiple_of(t * NENV, NENV)
        g = (g_in_scr[pl.ds(row, NENV), :]
             + jnp.dot(h, w_h4, preferred_element_type=jnp.float32))
        rz = jax.nn.sigmoid(g[:, : 2 * H])       # fused sigmoid push (r | z)
        r = rz[:, :H]
        z = rz[:, H:]
        n = jnp.tanh(g[:, 2 * H: 3 * H] + r * g[:, 3 * H:])
        h_new = (1.0 - z) * n + z * h                            # (NENV, H)
        h_all_scr[pl.ds(row, NENV), :] = h_new
        return h_new

    jax.lax.fori_loop(0, T, gru_step, h0_ref[...], unroll=True)

    # ---- Batched post-work on the stacked hiddens ---------------------------
    h_all = h_all_scr[...]                                       # (TN, H)
    heads = (jnp.dot(h_all, w_heads_ref[...],
                     preferred_element_type=jnp.float32)
             + b_heads_ref[...])                                 # (TN, A+1)
    logits = heads[:, :N_ACT]
    value = heads[:, N_ACT:N_ACT + 1]

    # log-softmax directly (no exp/div/log round trip -> no -inf poisoning).
    m = jnp.max(logits, axis=1, keepdims=True)
    shifted = logits - m
    lse = jnp.log(jnp.sum(jnp.exp(shifted), axis=1, keepdims=True))
    log_dist = shifted - lse                                     # (TN, A)

    # torch quirk: entropy = -sum(dist.mean() * log dist); dist.mean() == 1/A.
    entropy = -jnp.sum(log_dist, axis=1, keepdims=True) * (1.0 / N_ACT)

    # Categorical sample via Gumbel-max with host-side noise.
    gumbel = x_all[:, STATE_DIM + 1: STATE_DIM + 1 + N_ACT]      # (TN, A)
    pert = logits + gumbel
    pmax = jnp.max(pert, axis=1, keepdims=True)
    col = jax.lax.broadcasted_iota(jnp.int32, (TN, N_ACT), 1)
    action = jnp.min(jnp.where(pert >= pmax, col, N_ACT),
                     axis=1, keepdims=True)                      # (TN, 1) int32
    log_prob = jnp.sum(jnp.where(col == action, log_dist, 0.0),
                       axis=1, keepdims=True)

    # Single unmasked full-width store: [h_new | action | logp | value | ent | 0].
    colw = jax.lax.broadcasted_iota(jnp.int32, (TN, OUT_W), 1)
    scal = (jnp.where(colw == COL_ACT, action.astype(jnp.float32), 0.0)
            + jnp.where(colw == COL_LOGP, log_prob, 0.0)
            + jnp.where(colw == COL_VAL, value, 0.0)
            + jnp.where(colw == COL_ENT, entropy, 0.0))          # (TN, OUT_W)
    out_ref[...] = jnp.concatenate([h_all, scal[:, HIDDEN:]], axis=-1)


@jax.jit
def a2c_rollout(step_slab, hidden0, params):
    """Run T A2C forward steps inside one pallas_call (single invocation).

    step_slab: (T, NENV, STEP_W) = [state | 1.0 | gumbel | pad]
    hidden0:   (NENV, HIDDEN) initial GRU hidden
    params:    (w_in16, w_i4, w_h4, b_g4, w_heads, b_heads)
    Returns (actions, log_probs, values, entropies, hidden_outs), each with a
    leading T axis; hidden_outs[t] is the post-update hidden h_new of step t
    (the recurrent state the torch forward returns and feeds to step t+1).
    """
    T = step_slab.shape[0]
    w_in16, w_i4, w_h4, b_g4, w_heads, b_heads = params
    flat = step_slab.reshape(T * NENV, STEP_W)     # wrapper-side reshape (free)

    vmem_spec = pl.BlockSpec(memory_space=pltpu.MemorySpace.VMEM)
    out = pl.pallas_call(
        a2c_rollout_kernel,
        out_shape=jax.ShapeDtypeStruct((T * NENV, OUT_W), jnp.float32),
        in_specs=[vmem_spec] * 8,
        out_specs=vmem_spec,
        scratch_shapes=[
            pltpu.VMEM((T * NENV, 4 * HIDDEN), jnp.float32),   # g_in stage
            pltpu.VMEM((T * NENV, HIDDEN), jnp.float32),       # stacked hiddens
        ],
    )(flat, hidden0, w_in16, w_i4, w_h4, b_g4, w_heads, b_heads)

    out = out.reshape(T, NENV, OUT_W)
    hidden_outs = out[:, :, :HIDDEN]
    actions = out[:, :, COL_ACT:COL_ACT + 1]
    log_probs = out[:, :, COL_LOGP:COL_LOGP + 1]
    values = out[:, :, COL_VAL:COL_VAL + 1]
    entropies = out[:, :, COL_ENT:COL_ENT + 1]
    return actions, log_probs, values, entropies, hidden_outs


def pack_step_slab(states, gumbels):
    """Pack per-step states + Gumbel noise into the lane-dense input slab."""
    T = states.shape[0]
    ones = jnp.ones((T, NENV, 1), jnp.float32)
    pad = jnp.zeros((T, NENV, STEP_W - STATE_DIM - 1 - N_ACT), jnp.float32)
    return jnp.concatenate([states, ones, gumbels, pad], axis=-1)


def pack_params(w_in, b_in, w_ih, w_hh, b_ih, b_hh, w_pi, b_pi, w_v, b_v):
    """Fuse the torch-style (in, out) weights into the kernel layout."""
    H = HIDDEN
    z = jnp.zeros((H, H), jnp.float32)
    # Linear bias folded via the ones column; gumbel/pad rows MUST be zero.
    w_in16 = jnp.concatenate(
        [w_in, b_in[None, :],
         jnp.zeros((STEP_W - STATE_DIM - 1, H), jnp.float32)], axis=0)  # (16, H)
    # gates laid out as [r | z | i_n | h_n]  (n-gate halves kept separate
    # because GRUCell applies r only to the hidden half of n)
    w_i4 = jnp.concatenate([w_ih[:, :H], w_ih[:, H:2 * H], w_ih[:, 2 * H:], z], axis=1)
    w_h4 = jnp.concatenate([w_hh[:, :H], w_hh[:, H:2 * H], z, w_hh[:, 2 * H:]], axis=1)
    b_g4 = jnp.concatenate([b_ih[:H] + b_hh[:H],
                            b_ih[H:2 * H] + b_hh[H:2 * H],
                            b_ih[2 * H:], b_hh[2 * H:]])[None, :]        # (1, 4H)
    w_heads = jnp.concatenate([w_pi, w_v], axis=1)                        # (H, A+1)
    b_heads = jnp.concatenate([b_pi, b_v])[None, :]                       # (1, A+1)
    return (w_in16, w_i4, w_h4, b_g4, w_heads, b_heads)


def init_params(key):
    """Deterministic synthetic weights for the (policy+value, GRU) network."""
    ks = jax.random.split(key, 10)
    s = 0.1
    w_in = s * jax.random.normal(ks[0], (STATE_DIM, HIDDEN), jnp.float32)
    b_in = s * jax.random.normal(ks[1], (HIDDEN,), jnp.float32)
    w_ih = s * jax.random.normal(ks[2], (HIDDEN, 3 * HIDDEN), jnp.float32)
    w_hh = s * jax.random.normal(ks[3], (HIDDEN, 3 * HIDDEN), jnp.float32)
    b_ih = s * jax.random.normal(ks[4], (3 * HIDDEN,), jnp.float32)
    b_hh = s * jax.random.normal(ks[5], (3 * HIDDEN,), jnp.float32)
    w_pi = s * jax.random.normal(ks[6], (HIDDEN, N_ACT), jnp.float32)
    b_pi = s * jax.random.normal(ks[7], (N_ACT,), jnp.float32)
    w_v = s * jax.random.normal(ks[8], (HIDDEN, 1), jnp.float32)
    b_v = s * jax.random.normal(ks[9], (1,), jnp.float32)
    return pack_params(w_in, b_in, w_ih, w_hh, b_ih, b_hh, w_pi, b_pi, w_v, b_v)


if __name__ == "__main__":
    key = jax.random.PRNGKey(0)
    k_state, k_hidden, k_noise, k_params = jax.random.split(key, 4)

    states = jax.random.normal(k_state, (N_STEP, NENV, STATE_DIM), jnp.float32)
    gru_hidden = jax.random.normal(k_hidden, (NENV, HIDDEN), jnp.float32)
    gumbels = jax.random.gumbel(k_noise, (N_STEP, NENV, N_ACT), jnp.float32)
    params = init_params(k_params)

    step_slab = pack_step_slab(states, gumbels)
    actions, log_probs, values, entropies, hidden_outs = jax.block_until_ready(
        a2c_rollout(step_slab, gru_hidden, params))

    assert actions.shape == (N_STEP, NENV, 1)
    assert log_probs.shape == (N_STEP, NENV, 1)
    assert values.shape == (N_STEP, NENV, 1)
    assert entropies.shape == (N_STEP, NENV, 1)
    assert hidden_outs.shape == (N_STEP, NENV, HIDDEN)

    # Sanity: finite outputs, integer actions in range, entropy >= log(A)
    # (the torch-quirk entropy -sum(log p)/A is lower-bounded by log A).
    assert bool(jnp.all(jnp.isfinite(log_probs)))
    assert bool(jnp.all(jnp.isfinite(values)))
    assert bool(jnp.all(jnp.isfinite(hidden_outs)))
    assert bool(jnp.all((actions >= 0) & (actions <= N_ACT - 1)))
    assert bool(jnp.all(actions == jnp.round(actions)))
    assert bool(jnp.all(entropies >= jnp.log(float(N_ACT)) - 1e-4))
    # NOTE: actions come back float32 (like torch's pre-allocated zeros
    # tensor); downstream code must cast to int before env.step.
    print("KERNEL_OK")
</pallas_src>

<mosaic_0001>
module attributes {stable_mosaic.version = 11 : i64} {
  func.func @a2c_rollout_kernel(%arg0: memref<64x16xf32, #tpu.memory_space<vmem>>, %arg1: memref<8x32xf32, #tpu.memory_space<vmem>>, %arg2: memref<16x32xf32, #tpu.memory_space<vmem>>, %arg3: memref<32x128xf32, #tpu.memory_space<vmem>>, %arg4: memref<32x128xf32, #tpu.memory_space<vmem>>, %arg5: memref<1x128xf32, #tpu.memory_space<vmem>>, %arg6: memref<32x5xf32, #tpu.memory_space<vmem>>, %arg7: memref<1x5xf32, #tpu.memory_space<vmem>>, %arg8: memref<64x128xf32, #tpu.memory_space<vmem>>, %arg9: memref<64x128xf32, #tpu.memory_space<vmem>>, %arg10: memref<64x32xf32, #tpu.memory_space<vmem>>) attributes {dimension_semantics = [], scalar_prefetch = 0 : i64, scratch_operands = 2 : i64, tpu.core_type = #tpu.core_type<tc>} {
    %c0 = arith.constant 0 : index
    %c0_0 = arith.constant 0 : index
    %0 = vector.load %arg0[%c0, %c0_0] : memref<64x16xf32, #tpu.memory_space<vmem>>, vector<64x16xf32>
    %c0_1 = arith.constant 0 : index
    %c0_2 = arith.constant 0 : index
    %1 = vector.load %arg2[%c0_1, %c0_2] : memref<16x32xf32, #tpu.memory_space<vmem>>, vector<16x32xf32>
    %cst = arith.constant dense<0.000000e+00> : vector<64x32xf32>
    %2 = tpu.matmul %0, %1, %cst {dimension_numbers = #tpu.dot_dimension_numbers<[1], [0], [0], [1], [0, 0, 1, 1], [], []>} : vector<64x16xf32>, vector<16x32xf32>, vector<64x32xf32> -> vector<64x32xf32>
    %cst_3 = arith.constant 0.000000e+00 : f32
    %3 = vector.broadcast %cst_3 : f32 to vector<64x32xf32>
    %4 = arith.maximumf %2, %3 : vector<64x32xf32>
    %c0_4 = arith.constant 0 : index
    %c0_5 = arith.constant 0 : index
    %5 = vector.load %arg3[%c0_4, %c0_5] : memref<32x128xf32, #tpu.memory_space<vmem>>, vector<32x128xf32>
    %cst_6 = arith.constant dense<0.000000e+00> : vector<64x128xf32>
    %6 = tpu.matmul %4, %5, %cst_6 {dimension_numbers = #tpu.dot_dimension_numbers<[1], [0], [0], [1], [0, 0, 1, 1], [], []>} : vector<64x32xf32>, vector<32x128xf32>, vector<64x128xf32> -> vector<64x128xf32>
    %c0_7 = arith.constant 0 : index
    %c0_8 = arith.constant 0 : index
    %7 = vector.load %arg5[%c0_7, %c0_8] : memref<1x128xf32, #tpu.memory_space<vmem>>, vector<1x128xf32>
    %8 = vector.broadcast %7 : vector<1x128xf32> to vector<64x128xf32>
    %9 = arith.addf %6, %8 : vector<64x128xf32>
    %c0_9 = arith.constant 0 : index
    %c0_10 = arith.constant 0 : index
    %10 = vector.load %arg9[%c0_9, %c0_10] : memref<64x128xf32, #tpu.memory_space<vmem>>, vector<64x128xf32>
    tpu.vector_store %arg9[%c0_9, %c0_10], %9 {strides = array<i32>} : memref<64x128xf32, #tpu.memory_space<vmem>>, vector<64x128xf32>,
    %c0_11 = arith.constant 0 : index
    %c0_12 = arith.constant 0 : index
    %11 = vector.load %arg4[%c0_11, %c0_12] : memref<32x128xf32, #tpu.memory_space<vmem>>, vector<32x128xf32>
    %c0_13 = arith.constant 0 : index
    %c0_14 = arith.constant 0 : index
    %12 = vector.load %arg1[%c0_13, %c0_14] : memref<8x32xf32, #tpu.memory_space<vmem>>, vector<8x32xf32>
    %c0_i32 = arith.constant 0 : i32
    %c8_i32 = arith.constant 8 : i32
    %13 = arith.muli %c0_i32, %c8_i32 : i32
    %14 = tpu.assume_multiple %13, 8 : i32
    %15 = arith.index_cast %14 : i32 to index
    %c0_15 = arith.constant 0 : index
    %16 = vector.load %arg9[%15, %c0_15] : memref<64x128xf32, #tpu.memory_space<vmem>>, vector<8x128xf32>
    %cst_16 = arith.constant dense<0.000000e+00> : vector<8x128xf32>
    %17 = tpu.matmul %12, %11, %cst_16 {dimension_numbers = #tpu.dot_dimension_numbers<[1], [0], [0], [1], [0, 0, 1, 1], [], []>} : vector<8x32xf32>, vector<32x128xf32>, vector<8x128xf32> -> vector<8x128xf32>
    %18 = arith.addf %16, %17 : vector<8x128xf32>
    %19 = vector.extract_strided_slice %18 {offsets = [0, 0], sizes = [8, 64], strides = [1, 1]} : vector<8x128xf32> to vector<8x64xf32>
    %20 = arith.negf %19 : vector<8x64xf32>
    %21 = math.exp %20 : vector<8x64xf32>
    %cst_17 = arith.constant 1.000000e+00 : f32
    %22 = vector.broadcast %cst_17 : f32 to vector<8x64xf32>
    %23 = arith.addf %22, %21 : vector<8x64xf32>
    %24 = arith.divf %22, %23 : vector<8x64xf32>
    %25 = vector.extract_strided_slice %24 {offsets = [0, 0], sizes = [8, 32], strides = [1, 1]} : vector<8x64xf32> to vector<8x32xf32>
    %26 = vector.extract_strided_slice %24 {offsets = [0, 32], sizes = [8, 32], strides = [1, 1]} : vector<8x64xf32> to vector<8x32xf32>
    %27 = vector.extract_strided_slice %18 {offsets = [0, 64], sizes = [8, 32], strides = [1, 1]} : vector<8x128xf32> to vector<8x32xf32>
    %28 = vector.extract_strided_slice %18 {offsets = [0, 96], sizes = [8, 32], strides = [1, 1]} : vector<8x128xf32> to vector<8x32xf32>
    %29 = arith.mulf %25, %28 : vector<8x32xf32>
    %30 = arith.addf %27, %29 : vector<8x32xf32>
    %31 = math.tanh %30 : vector<8x32xf32>
    %cst_18 = arith.constant 1.000000e+00 : f32
    %32 = vector.broadcast %cst_18 : f32 to vector<8x32xf32>
    %33 = arith.subf %32, %26 : vector<8x32xf32>
    %34 = arith.mulf %33, %31 : vector<8x32xf32>
    %35 = arith.mulf %26, %12 : vector<8x32xf32>
    %36 = arith.addf %34, %35 : vector<8x32xf32>
    %37 = arith.index_cast %14 : i32 to index
    %c0_19 = arith.constant 0 : index
    %38 = vector.load %arg10[%37, %c0_19] : memref<64x32xf32, #tpu.memory_space<vmem>>, vector<8x32xf32>
    tpu.vector_store %arg10[%37, %c0_19], %36 {strides = array<i32>} : memref<64x32xf32, #tpu.memory_space<vmem>>, vector<8x32xf32>,
    %c1_i32 = arith.constant 1 : i32
    %c8_i32_20 = arith.constant 8 : i32
    %39 = arith.muli %c1_i32, %c8_i32_20 : i32
    %40 = tpu.assume_multiple %39, 8 : i32
    %41 = arith.index_cast %40 : i32 to index
    %c0_21 = arith.constant 0 : index
    %42 = vector.load %arg9[%41, %c0_21] : memref<64x128xf32, #tpu.memory_space<vmem>>, vector<8x128xf32>
    %cst_22 = arith.constant dense<0.000000e+00> : vector<8x128xf32>
    %43 = tpu.matmul %36, %11, %cst_22 {dimension_numbers = #tpu.dot_dimension_numbers<[1], [0], [0], [1], [0, 0, 1, 1], [], []>} : vector<8x32xf32>, vector<32x128xf32>, vector<8x128xf32> -> vector<8x128xf32>
    %44 = arith.addf %42, %43 : vector<8x128xf32>
    %45 = vector.extract_strided_slice %44 {offsets = [0, 0], sizes = [8, 64], strides = [1, 1]} : vector<8x128xf32> to vector<8x64xf32>
    %46 = arith.negf %45 : vector<8x64xf32>
    %47 = math.exp %46 : vector<8x64xf32>
    %cst_23 = arith.constant 1.000000e+00 : f32
    %48 = vector.broadcast %cst_23 : f32 to vector<8x64xf32>
    %49 = arith.addf %48, %47 : vector<8x64xf32>
    %50 = arith.divf %48, %49 : vector<8x64xf32>
    %51 = vector.extract_strided_slice %50 {offsets = [0, 0], sizes = [8, 32], strides = [1, 1]} : vector<8x64xf32> to vector<8x32xf32>
    %52 = vector.extract_strided_slice %50 {offsets = [0, 32], sizes = [8, 32], strides = [1, 1]} : vector<8x64xf32> to vector<8x32xf32>
    %53 = vector.extract_strided_slice %44 {offsets = [0, 64], sizes = [8, 32], strides = [1, 1]} : vector<8x128xf32> to vector<8x32xf32>
    %54 = vector.extract_strided_slice %44 {offsets = [0, 96], sizes = [8, 32], strides = [1, 1]} : vector<8x128xf32> to vector<8x32xf32>
    %55 = arith.mulf %51, %54 : vector<8x32xf32>
    %56 = arith.addf %53, %55 : vector<8x32xf32>
    %57 = math.tanh %56 : vector<8x32xf32>
    %cst_24 = arith.constant 1.000000e+00 : f32
    %58 = vector.broadcast %cst_24 : f32 to vector<8x32xf32>
    %59 = arith.subf %58, %52 : vector<8x32xf32>
    %60 = arith.mulf %59, %57 : vector<8x32xf32>
    %61 = arith.mulf %52, %36 : vector<8x32xf32>
    %62 = arith.addf %60, %61 : vector<8x32xf32>
    %63 = arith.index_cast %40 : i32 to index
    %c0_25 = arith.constant 0 : index
    %64 = vector.load %arg10[%63, %c0_25] : memref<64x32xf32, #tpu.memory_space<vmem>>, vector<8x32xf32>
    tpu.vector_store %arg10[%63, %c0_25], %62 {strides = array<i32>} : memref<64x32xf32, #tpu.memory_space<vmem>>, vector<8x32xf32>,
    %c2_i32 = arith.constant 2 : i32
    %c8_i32_26 = arith.constant 8 : i32
    %65 = arith.muli %c2_i32, %c8_i32_26 : i32
    %66 = tpu.assume_multiple %65, 8 : i32
    %67 = arith.index_cast %66 : i32 to index
    %c0_27 = arith.constant 0 : index
    %68 = vector.load %arg9[%67, %c0_27] : memref<64x128xf32, #tpu.memory_space<vmem>>, vector<8x128xf32>
    %cst_28 = arith.constant dense<0.000000e+00> : vector<8x128xf32>
    %69 = tpu.matmul %62, %11, %cst_28 {dimension_numbers = #tpu.dot_dimension_numbers<[1], [0], [0], [1], [0, 0, 1, 1], [], []>} : vector<8x32xf32>, vector<32x128xf32>, vector<8x128xf32> -> vector<8x128xf32>
    %70 = arith.addf %68, %69 : vector<8x128xf32>
    %71 = vector.extract_strided_slice %70 {offsets = [0, 0], sizes = [8, 64], strides = [1, 1]} : vector<8x128xf32> to vector<8x64xf32>
    %72 = arith.negf %71 : vector<8x64xf32>
    %73 = math.exp %72 : vector<8x64xf32>
    %cst_29 = arith.constant 1.000000e+00 : f32
    %74 = vector.broadcast %cst_29 : f32 to vector<8x64xf32>
    %75 = arith.addf %74, %73 : vector<8x64xf32>
    %76 = arith.divf %74, %75 : vector<8x64xf32>
    %77 = vector.extract_strided_slice %76 {offsets = [0, 0], sizes = [8, 32], strides = [1, 1]} : vector<8x64xf32> to vector<8x32xf32>
    %78 = vector.extract_strided_slice %76 {offsets = [0, 32], sizes = [8, 32], strides = [1, 1]} : vector<8x64xf32> to vector<8x32xf32>
    %79 = vector.extract_strided_slice %70 {offsets = [0, 64], sizes = [8, 32], strides = [1, 1]} : vector<8x128xf32> to vector<8x32xf32>
    %80 = vector.extract_strided_slice %70 {offsets = [0, 96], sizes = [8, 32], strides = [1, 1]} : vector<8x128xf32> to vector<8x32xf32>
    %81 = arith.mulf %77, %80 : vector<8x32xf32>
    %82 = arith.addf %79, %81 : vector<8x32xf32>
    %83 = math.tanh %82 : vector<8x32xf32>
    %cst_30 = arith.constant 1.000000e+00 : f32
    %84 = vector.broadcast %cst_30 : f32 to vector<8x32xf32>
    %85 = arith.subf %84, %78 : vector<8x32xf32>
    %86 = arith.mulf %85, %83 : vector<8x32xf32>
    %87 = arith.mulf %78, %62 : vector<8x32xf32>
    %88 = arith.addf %86, %87 : vector<8x32xf32>
    %89 = arith.index_cast %66 : i32 to index
    %c0_31 = arith.constant 0 : index
    %90 = vector.load %arg10[%89, %c0_31] : memref<64x32xf32, #tpu.memory_space<vmem>>, vector<8x32xf32>
    tpu.vector_store %arg10[%89, %c0_31], %88 {strides = array<i32>} : memref<64x32xf32, #tpu.memory_space<vmem>>, vector<8x32xf32>,
    %c3_i32 = arith.constant 3 : i32
    %c8_i32_32 = arith.constant 8 : i32
    %91 = arith.muli %c3_i32, %c8_i32_32 : i32
    %92 = tpu.assume_multiple %91, 8 : i32
    %93 = arith.index_cast %92 : i32 to index
    %c0_33 = arith.constant 0 : index
    %94 = vector.load %arg9[%93, %c0_33] : memref<64x128xf32, #tpu.memory_space<vmem>>, vector<8x128xf32>
    %cst_34 = arith.constant dense<0.000000e+00> : vector<8x128xf32>
    %95 = tpu.matmul %88, %11, %cst_34 {dimension_numbers = #tpu.dot_dimension_numbers<[1], [0], [0], [1], [0, 0, 1, 1], [], []>} : vector<8x32xf32>, vector<32x128xf32>, vector<8x128xf32> -> vector<8x128xf32>
    %96 = arith.addf %94, %95 : vector<8x128xf32>
    %97 = vector.extract_strided_slice %96 {offsets = [0, 0], sizes = [8, 64], strides = [1, 1]} : vector<8x128xf32> to vector<8x64xf32>
    %98 = arith.negf %97 : vector<8x64xf32>
    %99 = math.exp %98 : vector<8x64xf32>
    %cst_35 = arith.constant 1.000000e+00 : f32
    %100 = vector.broadcast %cst_35 : f32 to vector<8x64xf32>
    %101 = arith.addf %100, %99 : vector<8x64xf32>
    %102 = arith.divf %100, %101 : vector<8x64xf32>
    %103 = vector.extract_strided_slice %102 {offsets = [0, 0], sizes = [8, 32], strides = [1, 1]} : vector<8x64xf32> to vector<8x32xf32>
    %104 = vector.extract_strided_slice %102 {offsets = [0, 32], sizes = [8, 32], strides = [1, 1]} : vector<8x64xf32> to vector<8x32xf32>
    %105 = vector.extract_strided_slice %96 {offsets = [0, 64], sizes = [8, 32], strides = [1, 1]} : vector<8x128xf32> to vector<8x32xf32>
    %106 = vector.extract_strided_slice %96 {offsets = [0, 96], sizes = [8, 32], strides = [1, 1]} : vector<8x128xf32> to vector<8x32xf32>
    %107 = arith.mulf %103, %106 : vector<8x32xf32>
    %108 = arith.addf %105, %107 : vector<8x32xf32>
    %109 = math.tanh %108 : vector<8x32xf32>
    %cst_36 = arith.constant 1.000000e+00 : f32
    %110 = vector.broadcast %cst_36 : f32 to vector<8x32xf32>
    %111 = arith.subf %110, %104 : vector<8x32xf32>
    %112 = arith.mulf %111, %109 : vector<8x32xf32>
    %113 = arith.mulf %104, %88 : vector<8x32xf32>
    %114 = arith.addf %112, %113 : vector<8x32xf32>
    %115 = arith.index_cast %92 : i32 to index
    %c0_37 = arith.constant 0 : index
    %116 = vector.load %arg10[%115, %c0_37] : memref<64x32xf32, #tpu.memory_space<vmem>>, vector<8x32xf32>
    tpu.vector_store %arg10[%115, %c0_37], %114 {strides = array<i32>} : memref<64x32xf32, #tpu.memory_space<vmem>>, vector<8x32xf32>,
    %c4_i32 = arith.constant 4 : i32
    %c8_i32_38 = arith.constant 8 : i32
    %117 = arith.muli %c4_i32, %c8_i32_38 : i32
    %118 = tpu.assume_multiple %117, 8 : i32
    %119 = arith.index_cast %118 : i32 to index
    %c0_39 = arith.constant 0 : index
    %120 = vector.load %arg9[%119, %c0_39] : memref<64x128xf32, #tpu.memory_space<vmem>>, vector<8x128xf32>
    %cst_40 = arith.constant dense<0.000000e+00> : vector<8x128xf32>
    %121 = tpu.matmul %114, %11, %cst_40 {dimension_numbers = #tpu.dot_dimension_numbers<[1], [0], [0], [1], [0, 0, 1, 1], [], []>} : vector<8x32xf32>, vector<32x128xf32>, vector<8x128xf32> -> vector<8x128xf32>
    %122 = arith.addf %120, %121 : vector<8x128xf32>
    %123 = vector.extract_strided_slice %122 {offsets = [0, 0], sizes = [8, 64], strides = [1, 1]} : vector<8x128xf32> to vector<8x64xf32>
    %124 = arith.negf %123 : vector<8x64xf32>
    %125 = math.exp %124 : vector<8x64xf32>
    %cst_41 = arith.constant 1.000000e+00 : f32
    %126 = vector.broadcast %cst_41 : f32 to vector<8x64xf32>
    %127 = arith.addf %126, %125 : vector<8x64xf32>
    %128 = arith.divf %126, %127 : vector<8x64xf32>
    %129 = vector.extract_strided_slice %128 {offsets = [0, 0], sizes = [8, 32], strides = [1, 1]} : vector<8x64xf32> to vector<8x32xf32>
    %130 = vector.extract_strided_slice %128 {offsets = [0, 32], sizes = [8, 32], strides = [1, 1]} : vector<8x64xf32> to vector<8x32xf32>
    %131 = vector.extract_strided_slice %122 {offsets = [0, 64], sizes = [8, 32], strides = [1, 1]} : vector<8x128xf32> to vector<8x32xf32>
    %132 = vector.extract_strided_slice %122 {offsets = [0, 96], sizes = [8, 32], strides = [1, 1]} : vector<8x128xf32> to vector<8x32xf32>
    %133 = arith.mulf %129, %132 : vector<8x32xf32>
    %134 = arith.addf %131, %133 : vector<8x32xf32>
    %135 = math.tanh %134 : vector<8x32xf32>
    %cst_42 = arith.constant 1.000000e+00 : f32
    %136 = vector.broadcast %cst_42 : f32 to vector<8x32xf32>
    %137 = arith.subf %136, %130 : vector<8x32xf32>
    %138 = arith.mulf %137, %135 : vector<8x32xf32>
    %139 = arith.mulf %130, %114 : vector<8x32xf32>
    %140 = arith.addf %138, %139 : vector<8x32xf32>
    %141 = arith.index_cast %118 : i32 to index
    %c0_43 = arith.constant 0 : index
    %142 = vector.load %arg10[%141, %c0_43] : memref<64x32xf32, #tpu.memory_space<vmem>>, vector<8x32xf32>
    tpu.vector_store %arg10[%141, %c0_43], %140 {strides = array<i32>} : memref<64x32xf32, #tpu.memory_space<vmem>>, vector<8x32xf32>,
    %c5_i32 = arith.constant 5 : i32
    %c8_i32_44 = arith.constant 8 : i32
    %143 = arith.muli %c5_i32, %c8_i32_44 : i32
    %144 = tpu.assume_multiple %143, 8 : i32
    %145 = arith.index_cast %144 : i32 to index
    %c0_45 = arith.constant 0 : index
    %146 = vector.load %arg9[%145, %c0_45] : memref<64x128xf32, #tpu.memory_space<vmem>>, vector<8x128xf32>
    %cst_46 = arith.constant dense<0.000000e+00> : vector<8x128xf32>
    %147 = tpu.matmul %140, %11, %cst_46 {dimension_numbers = #tpu.dot_dimension_numbers<[1], [0], [0], [1], [0, 0, 1, 1], [], []>} : vector<8x32xf32>, vector<32x128xf32>, vector<8x128xf32> -> vector<8x128xf32>
    %148 = arith.addf %146, %147 : vector<8x128xf32>
    %149 = vector.extract_strided_slice %148 {offsets = [0, 0], sizes = [8, 64], strides = [1, 1]} : vector<8x128xf32> to vector<8x64xf32>
    %150 = arith.negf %149 : vector<8x64xf32>
    %151 = math.exp %150 : vector<8x64xf32>
    %cst_47 = arith.constant 1.000000e+00 : f32
    %152 = vector.broadcast %cst_47 : f32 to vector<8x64xf32>
    %153 = arith.addf %152, %151 : vector<8x64xf32>
    %154 = arith.divf %152, %153 : vector<8x64xf32>
    %155 = vector.extract_strided_slice %154 {offsets = [0, 0], sizes = [8, 32], strides = [1, 1]} : vector<8x64xf32> to vector<8x32xf32>
    %156 = vector.extract_strided_slice %154 {offsets = [0, 32], sizes = [8, 32], strides = [1, 1]} : vector<8x64xf32> to vector<8x32xf32>
    %157 = vector.extract_strided_slice %148 {offsets = [0, 64], sizes = [8, 32], strides = [1, 1]} : vector<8x128xf32> to vector<8x32xf32>
    %158 = vector.extract_strided_slice %148 {offsets = [0, 96], sizes = [8, 32], strides = [1, 1]} : vector<8x128xf32> to vector<8x32xf32>
    %159 = arith.mulf %155, %158 : vector<8x32xf32>
    %160 = arith.addf %157, %159 : vector<8x32xf32>
    %161 = math.tanh %160 : vector<8x32xf32>
    %cst_48 = arith.constant 1.000000e+00 : f32
    %162 = vector.broadcast %cst_48 : f32 to vector<8x32xf32>
    %163 = arith.subf %162, %156 : vector<8x32xf32>
    %164 = arith.mulf %163, %161 : vector<8x32xf32>
    %165 = arith.mulf %156, %140 : vector<8x32xf32>
    %166 = arith.addf %164, %165 : vector<8x32xf32>
    %167 = arith.index_cast %144 : i32 to index
    %c0_49 = arith.constant 0 : index
    %168 = vector.load %arg10[%167, %c0_49] : memref<64x32xf32, #tpu.memory_space<vmem>>, vector<8x32xf32>
    tpu.vector_store %arg10[%167, %c0_49], %166 {strides = array<i32>} : memref<64x32xf32, #tpu.memory_space<vmem>>, vector<8x32xf32>,
    %c6_i32 = arith.constant 6 : i32
    %c8_i32_50 = arith.constant 8 : i32
    %169 = arith.muli %c6_i32, %c8_i32_50 : i32
    %170 = tpu.assume_multiple %169, 8 : i32
    %171 = arith.index_cast %170 : i32 to index
    %c0_51 = arith.constant 0 : index
    %172 = vector.load %arg9[%171, %c0_51] : memref<64x128xf32, #tpu.memory_space<vmem>>, vector<8x128xf32>
    %cst_52 = arith.constant dense<0.000000e+00> : vector<8x128xf32>
    %173 = tpu.matmul %166, %11, %cst_52 {dimension_numbers = #tpu.dot_dimension_numbers<[1], [0], [0], [1], [0, 0, 1, 1], [], []>} : vector<8x32xf32>, vector<32x128xf32>, vector<8x128xf32> -> vector<8x128xf32>
    %174 = arith.addf %172, %173 : vector<8x128xf32>
    %175 = vector.extract_strided_slice %174 {offsets = [0, 0], sizes = [8, 64], strides = [1, 1]} : vector<8x128xf32> to vector<8x64xf32>
    %176 = arith.negf %175 : vector<8x64xf32>
    %177 = math.exp %176 : vector<8x64xf32>
    %cst_53 = arith.constant 1.000000e+00 : f32
    %178 = vector.broadcast %cst_53 : f32 to vector<8x64xf32>
    %179 = arith.addf %178, %177 : vector<8x64xf32>
    %180 = arith.divf %178, %179 : vector<8x64xf32>
    %181 = vector.extract_strided_slice %180 {offsets = [0, 0], sizes = [8, 32], strides = [1, 1]} : vector<8x64xf32> to vector<8x32xf32>
    %182 = vector.extract_strided_slice %180 {offsets = [0, 32], sizes = [8, 32], strides = [1, 1]} : vector<8x64xf32> to vector<8x32xf32>
    %183 = vector.extract_strided_slice %174 {offsets = [0, 64], sizes = [8, 32], strides = [1, 1]} : vector<8x128xf32> to vector<8x32xf32>
    %184 = vector.extract_strided_slice %174 {offsets = [0, 96], sizes = [8, 32], strides = [1, 1]} : vector<8x128xf32> to vector<8x32xf32>
    %185 = arith.mulf %181, %184 : vector<8x32xf32>
    %186 = arith.addf %183, %185 : vector<8x32xf32>
    %187 = math.tanh %186 : vector<8x32xf32>
    %cst_54 = arith.constant 1.000000e+00 : f32
    %188 = vector.broadcast %cst_54 : f32 to vector<8x32xf32>
    %189 = arith.subf %188, %182 : vector<8x32xf32>
    %190 = arith.mulf %189, %187 : vector<8x32xf32>
    %191 = arith.mulf %182, %166 : vector<8x32xf32>
    %192 = arith.addf %190, %191 : vector<8x32xf32>
    %193 = arith.index_cast %170 : i32 to index
    %c0_55 = arith.constant 0 : index
    %194 = vector.load %arg10[%193, %c0_55] : memref<64x32xf32, #tpu.memory_space<vmem>>, vector<8x32xf32>
    tpu.vector_store %arg10[%193, %c0_55], %192 {strides = array<i32>} : memref<64x32xf32, #tpu.memory_space<vmem>>, vector<8x32xf32>,
    %c7_i32 = arith.constant 7 : i32
    %c8_i32_56 = arith.constant 8 : i32
    %195 = arith.muli %c7_i32, %c8_i32_56 : i32
    %196 = tpu.assume_multiple %195, 8 : i32
    %197 = arith.index_cast %196 : i32 to index
    %c0_57 = arith.constant 0 : index
    %198 = vector.load %arg9[%197, %c0_57] : memref<64x128xf32, #tpu.memory_space<vmem>>, vector<8x128xf32>
    %cst_58 = arith.constant dense<0.000000e+00> : vector<8x128xf32>
    %199 = tpu.matmul %192, %11, %cst_58 {dimension_numbers = #tpu.dot_dimension_numbers<[1], [0], [0], [1], [0, 0, 1, 1], [], []>} : vector<8x32xf32>, vector<32x128xf32>, vector<8x128xf32> -> vector<8x128xf32>
    %200 = arith.addf %198, %199 : vector<8x128xf32>
    %201 = vector.extract_strided_slice %200 {offsets = [0, 0], sizes = [8, 64], strides = [1, 1]} : vector<8x128xf32> to vector<8x64xf32>
    %202 = arith.negf %201 : vector<8x64xf32>
    %203 = math.exp %202 : vector<8x64xf32>
    %cst_59 = arith.constant 1.000000e+00 : f32
    %204 = vector.broadcast %cst_59 : f32 to vector<8x64xf32>
    %205 = arith.addf %204, %203 : vector<8x64xf32>
    %206 = arith.divf %204, %205 : vector<8x64xf32>
    %207 = vector.extract_strided_slice %206 {offsets = [0, 0], sizes = [8, 32], strides = [1, 1]} : vector<8x64xf32> to vector<8x32xf32>
    %208 = vector.extract_strided_slice %206 {offsets = [0, 32], sizes = [8, 32], strides = [1, 1]} : vector<8x64xf32> to vector<8x32xf32>
    %209 = vector.extract_strided_slice %200 {offsets = [0, 64], sizes = [8, 32], strides = [1, 1]} : vector<8x128xf32> to vector<8x32xf32>
    %210 = vector.extract_strided_slice %200 {offsets = [0, 96], sizes = [8, 32], strides = [1, 1]} : vector<8x128xf32> to vector<8x32xf32>
    %211 = arith.mulf %207, %210 : vector<8x32xf32>
    %212 = arith.addf %209, %211 : vector<8x32xf32>
    %213 = math.tanh %212 : vector<8x32xf32>
    %cst_60 = arith.constant 1.000000e+00 : f32
    %214 = vector.broadcast %cst_60 : f32 to vector<8x32xf32>
    %215 = arith.subf %214, %208 : vector<8x32xf32>
    %216 = arith.mulf %215, %213 : vector<8x32xf32>
    %217 = arith.mulf %208, %192 : vector<8x32xf32>
    %218 = arith.addf %216, %217 : vector<8x32xf32>
    %219 = arith.index_cast %196 : i32 to index
    %c0_61 = arith.constant 0 : index
    %220 = vector.load %arg10[%219, %c0_61] : memref<64x32xf32, #tpu.memory_space<vmem>>, vector<8x32xf32>
    tpu.vector_store %arg10[%219, %c0_61], %218 {strides = array<i32>} : memref<64x32xf32, #tpu.memory_space<vmem>>, vector<8x32xf32>,
    %c8_i32_62 = arith.constant 8 : i32
    %c0_63 = arith.constant 0 : index
    %c0_64 = arith.constant 0 : index
    %221 = vector.load %arg10[%c0_63, %c0_64] : memref<64x32xf32, #tpu.memory_space<vmem>>, vector<64x32xf32>
    %c0_65 = arith.constant 0 : index
    %c0_66 = arith.constant 0 : index
    %222 = vector.load %arg6[%c0_65, %c0_66] : memref<32x5xf32, #tpu.memory_space<vmem>>, vector<32x5xf32>
    %cst_67 = arith.constant dense<0.000000e+00> : vector<64x5xf32>
    %223 = tpu.matmul %221, %222, %cst_67 {dimension_numbers = #tpu.dot_dimension_numbers<[1], [0], [0], [1], [0, 0, 1, 1], [], []>} : vector<64x32xf32>, vector<32x5xf32>, vector<64x5xf32> -> vector<64x5xf32>
    %c0_68 = arith.constant 0 : index
    %c0_69 = arith.constant 0 : index
    %224 = vector.load %arg7[%c0_68, %c0_69] : memref<1x5xf32, #tpu.memory_space<vmem>>, vector<1x5xf32>
    %225 = vector.broadcast %224 : vector<1x5xf32> to vector<64x5xf32>
    %226 = arith.addf %223, %225 : vector<64x5xf32>
    %227 = vector.extract_strided_slice %226 {offsets = [0, 0], sizes = [64, 4], strides = [1, 1]} : vector<64x5xf32> to vector<64x4xf32>
    %228 = vector.extract_strided_slice %226 {offsets = [0, 4], sizes = [64, 1], strides = [1, 1]} : vector<64x5xf32> to vector<64x1xf32>
    %cst_70 = arith.constant dense<0xFF800000> : vector<64xf32>
    %229 = vector.multi_reduction <maximumf>, %227, %cst_70 [1] : vector<64x4xf32> to vector<64xf32>
    %230 = vector.shape_cast %229 : vector<64xf32> to vector<64x1xf32>
    %231 = vector.broadcast %230 : vector<64x1xf32> to vector<64x4xf32>
    %232 = arith.subf %227, %231 : vector<64x4xf32>
    %233 = math.exp %232 : vector<64x4xf32>
    %cst_71 = arith.constant dense<0.000000e+00> : vector<64xf32>
    %234 = vector.multi_reduction <add>, %233, %cst_71 [1] : vector<64x4xf32> to vector<64xf32>
    %235 = vector.shape_cast %234 : vector<64xf32> to vector<64x1xf32>
    %236 = math.log %235 : vector<64x1xf32>
    %237 = vector.broadcast %236 : vector<64x1xf32> to vector<64x4xf32>
    %238 = arith.subf %232, %237 : vector<64x4xf32>
    %cst_72 = arith.constant dense<0.000000e+00> : vector<64xf32>
    %239 = vector.multi_reduction <add>, %238, %cst_72 [1] : vector<64x4xf32> to vector<64xf32>
    %240 = vector.shape_cast %239 : vector<64xf32> to vector<64x1xf32>
    %cst_73 = arith.constant 0.000000e+00 : f32
    %241 = vector.broadcast %cst_73 : f32 to vector<64x1xf32>
    %242 = arith.subf %241, %240 : vector<64x1xf32>
    %cst_74 = arith.constant 2.500000e-01 : f32
    %243 = vector.broadcast %cst_74 : f32 to vector<64x1xf32>
    %244 = arith.mulf %242, %243 : vector<64x1xf32>
    %245 = vector.extract_strided_slice %0 {offsets = [0, 9], sizes = [64, 4], strides = [1, 1]} : vector<64x16xf32> to vector<64x4xf32>
    %246 = arith.addf %227, %245 : vector<64x4xf32>
    %cst_75 = arith.constant dense<0xFF800000> : vector<64xf32>
    %247 = vector.multi_reduction <maximumf>, %246, %cst_75 [1] : vector<64x4xf32> to vector<64xf32>
    %248 = vector.shape_cast %247 : vector<64xf32> to vector<64x1xf32>
    %249 = tpu.iota {dimensions = array<i32: 1>} : vector<64x4xi32>
    %250 = vector.broadcast %248 : vector<64x1xf32> to vector<64x4xf32>
    %251 = arith.cmpf oge, %246, %250 : vector<64x4xf32>
    %c4_i32_76 = arith.constant 4 : i32
    %252 = vector.broadcast %c4_i32_76 : i32 to vector<64x4xi32>
    %253 = arith.select %251, %249, %252 : vector<64x4xi1>, vector<64x4xi32>
    %cst_77 = arith.constant dense<2147483647> : vector<64xi32>
    %254 = vector.multi_reduction <minsi>, %253, %cst_77 [1] : vector<64x4xi32> to vector<64xi32>
    %255 = vector.shape_cast %254 : vector<64xi32> to vector<64x1xi32>
    %256 = vector.broadcast %255 : vector<64x1xi32> to vector<64x4xi32>
    %257 = arith.cmpi eq, %249, %256 : vector<64x4xi32>
    %cst_78 = arith.constant 0.000000e+00 : f32
    %258 = vector.broadcast %cst_78 : f32 to vector<64x4xf32>
    %259 = arith.select %257, %238, %258 : vector<64x4xi1>, vector<64x4xf32>
    %cst_79 = arith.constant dense<0.000000e+00> : vector<64xf32>
    %260 = vector.multi_reduction <add>, %259, %cst_79 [1] : vector<64x4xf32> to vector<64xf32>
    %261 = vector.shape_cast %260 : vector<64xf32> to vector<64x1xf32>
    %262 = tpu.iota {dimensions = array<i32: 1>} : vector<64x128xi32>
    %c32_i32 = arith.constant 32 : i32
    %263 = vector.broadcast %c32_i32 : i32 to vector<64x128xi32>
    %264 = arith.cmpi eq, %262, %263 : vector<64x128xi32>
    %265 = arith.sitofp %255 : vector<64x1xi32> to vector<64x1xf32>
    %cst_80 = arith.constant 0.000000e+00 : f32
    %266 = vector.shape_cast %265 : vector<64x1xf32> to vector<64x1xf32>
    %267 = vector.broadcast %266 : vector<64x1xf32> to vector<64x128xf32>
    %268 = vector.broadcast %cst_80 : f32 to vector<64x128xf32>
    %269 = arith.select %264, %267, %268 : vector<64x128xi1>, vector<64x128xf32>
    %c33_i32 = arith.constant 33 : i32
    %270 = vector.broadcast %c33_i32 : i32 to vector<64x128xi32>
    %271 = arith.cmpi eq, %262, %270 : vector<64x128xi32>
    %cst_81 = arith.constant 0.000000e+00 : f32
    %272 = vector.shape_cast %261 : vector<64x1xf32> to vector<64x1xf32>
    %273 = vector.broadcast %272 : vector<64x1xf32> to vector<64x128xf32>
    %274 = vector.broadcast %cst_81 : f32 to vector<64x128xf32>
    %275 = arith.select %271, %273, %274 : vector<64x128xi1>, vector<64x128xf32>
    %276 = arith.addf %269, %275 : vector<64x128xf32>
    %c34_i32 = arith.constant 34 : i32
    %277 = vector.broadcast %c34_i32 : i32 to vector<64x128xi32>
    %278 = arith.cmpi eq, %262, %277 : vector<64x128xi32>
    %cst_82 = arith.constant 0.000000e+00 : f32
    %279 = vector.shape_cast %228 : vector<64x1xf32> to vector<64x1xf32>
    %280 = vector.broadcast %279 : vector<64x1xf32> to vector<64x128xf32>
    %281 = vector.broadcast %cst_82 : f32 to vector<64x128xf32>
    %282 = arith.select %278, %280, %281 : vector<64x128xi1>, vector<64x128xf32>
    %283 = arith.addf %276, %282 : vector<64x128xf32>
    %c35_i32 = arith.constant 35 : i32
    %284 = vector.broadcast %c35_i32 : i32 to vector<64x128xi32>
    %285 = arith.cmpi eq, %262, %284 : vector<64x128xi32>
    %cst_83 = arith.constant 0.000000e+00 : f32
    %286 = vector.shape_cast %244 : vector<64x1xf32> to vector<64x1xf32>
    %287 = vector.broadcast %286 : vector<64x1xf32> to vector<64x128xf32>
    %288 = vector.broadcast %cst_83 : f32 to vector<64x128xf32>
    %289 = arith.select %285, %287, %288 : vector<64x128xi1>, vector<64x128xf32>
    %290 = arith.addf %283, %289 : vector<64x128xf32>
    %291 = vector.extract_strided_slice %290 {offsets = [0, 32], sizes = [64, 96], strides = [1, 1]} : vector<64x128xf32> to vector<64x96xf32>
    %292 = tpu.concatenate %221, %291 in 1 : vector<64x32xf32>, vector<64x96xf32> -> vector<64x128xf32>
    %c0_84 = arith.constant 0 : index
    %c0_85 = arith.constant 0 : index
    %293 = vector.load %arg8[%c0_84, %c0_85] : memref<64x128xf32, #tpu.memory_space<vmem>>, vector<64x128xf32>
    tpu.vector_store %arg8[%c0_84, %c0_85], %292 {strides = array<i32>} : memref<64x128xf32, #tpu.memory_space<vmem>>, vector<64x128xf32>,
    return
  }
}

</mosaic_0001>

<llo_original>
// kernel: a2c_rollout.1
$region0: #{a2c_rollout.1}
  #allocation0 [shape = 'u32[]', space=smem, size = 0x4, offset = 0x4, fixed_abs, tag = 'smem constant byte address 0x4 - core index']
  #allocation1 [shape = 'u32[144,128]{1,0:T(1,128)}', space=vmem, size = 0x12000, scoped, tag = 'internal scratch']
  #allocation2 [shape = 'f32[64,128]{1,0:T(8,128)}', space=vmem, size = 0x8000, scoped, tag = 'scratch operand']
  #allocation3 [shape = 'f32[64,32]{1,0:T(8,128)}', space=vmem, size = 0x8000, scoped, tag = 'scratch operand']
  %s0 = inlined_call_operand.hbm [shape: f32[64,16], index: 0, kind: input, shape index: {}]
  %s1 = inlined_call_operand.vmem [shape: f32[8,32], index: 1, kind: input, shape index: {}]
  %s2 = inlined_call_operand.hbm [shape: f32[16,32], index: 2, kind: input, shape index: {}]
  %s3 = inlined_call_operand.vmem [shape: f32[32,128], index: 3, kind: input, shape index: {}]
  %s4 = inlined_call_operand.hbm [shape: f32[32,128], index: 4, kind: input, shape index: {}]
  %s5 = inlined_call_operand.vmem [shape: f32[1,128], index: 5, kind: input, shape index: {}]
  %s6 = inlined_call_operand.vmem [shape: f32[32,5], index: 6, kind: input, shape index: {}]
  %s7 = inlined_call_operand.vmem [shape: f32[1,5], index: 7, kind: input, shape index: {}]
  %s8 = inlined_call_operand.vmem [shape: f32[64,128], index: 8, kind: output, shape index: {}]
  %s9 = sld [smem:[#allocation0]]
  $region54: #{a2c_rollout.1} parent=0
    _
  %s11 = ssub.s32 1, %s9
  %s12 = scalar_select 0, %s11, %s9
  $region1: #{a2c_rollout.1} parent=0
    #allocation4 [shape = 'u8[32768]{0}', space=vmem, size = 0x8000, scoped, tag = 'input window, operand 0, single buffered']
    #allocation5 [shape = 's32[1]{0}', space=sflag, size = 0x4, scoped, tag = 'scoped memory for a2c_rollout.1']
    #allocation6 [shape = 'u8[8192]{0}', space=vmem, size = 0x2000, scoped, tag = 'input window, operand 2, single buffered']
    #allocation7 [shape = 's32[1]{0}', space=sflag, size = 0x4, scoped, tag = 'scoped memory for a2c_rollout.1']
    #allocation8 [shape = 'u8[16384]{0}', space=vmem, size = 0x4000, scoped, tag = 'input window, operand 4, single buffered']
    %13 = vsyncpa [#allocation5], 0
    %14 = vsyncpa [#allocation7], 0
    // Predicated region
    $region2: #{a2c_rollout.1} parent=1 // pred_check
      _
    $region3: #{a2c_rollout.1} parent=1 // pred_check_branch
      %16 = sbr.rel (0) target = $region5
    $region4: #{a2c_rollout.1} parent=1 // pred_region
      %s18 = ssub.s32 1024, 1024
      %19 = vsyncadd [#allocation5], %s18
      %s20 = sshll.u32 [#allocation4], 4
      %s21 = int_to_ptr.vmem [resolvable:$true] %s20
      %26 = dma.hbm_to_vmem [thread:$0]  %s0, 1024, %s21, [#allocation5], 128, 128, 8
    $region5: #{a2c_rollout.1} parent=1 // pred_fallthru
      _
    // Predicated region
    $region6: #{a2c_rollout.1} parent=1 // pred_check
      _
    $region7: #{a2c_rollout.1} parent=1 // pred_check_branch
      %28 = sbr.rel (0) target = $region9
    $region8: #{a2c_rollout.1} parent=1 // pred_region
      _
    $region9: #{a2c_rollout.1} parent=1 // pred_fallthru
      _
    // Predicated region
    $region10: #{a2c_rollout.1} parent=1 // pred_check
      _
    $region11: #{a2c_rollout.1} parent=1 // pred_check_branch
      %30 = sbr.rel (0) target = $region13
    $region12: #{a2c_rollout.1} parent=1 // pred_region
      %s32 = ssub.s32 256, 256
      %33 = vsyncadd [#allocation7], %s32
      %s34 = sshll.u32 [#allocation6], 4
      %s35 = int_to_ptr.vmem [resolvable:$true] %s34
      %40 = dma.hbm_to_vmem [thread:$0]  %s2, 256, %s35, [#allocation7], 128, 128, 8
    $region13: #{a2c_rollout.1} parent=1 // pred_fallthru
      _
    // Predicated region
    $region14: #{a2c_rollout.1} parent=1 // pred_check
      _
    $region15: #{a2c_rollout.1} parent=1 // pred_check_branch
      %42 = sbr.rel (0) target = $region17
    $region16: #{a2c_rollout.1} parent=1 // pred_region
      _
    $region17: #{a2c_rollout.1} parent=1 // pred_fallthru
      _
    // Predicated region
    $region18: #{a2c_rollout.1} parent=1 // pred_check
      _
    $region19: #{a2c_rollout.1} parent=1 // pred_check_branch
      %44 = sbr.rel (0) target = $region21
    $region20: #{a2c_rollout.1} parent=1 // pred_region
      %s46 = ssub.s32 512, 512
      %47 = vsyncadd [#allocation7], %s46
      %s48 = sshll.u32 [#allocation8], 4
      %s49 = int_to_ptr.vmem [resolvable:$true] %s48
      %54 = dma.hbm_to_vmem [thread:$0]  %s4, 512, %s49, [#allocation7], 128, 128, 8
    $region21: #{a2c_rollout.1} parent=1 // pred_fallthru
      _
    // Predicated region
    $region22: #{a2c_rollout.1} parent=1 // pred_check
      _
    $region23: #{a2c_rollout.1} parent=1 // pred_check_branch
      %56 = sbr.rel (0) target = $region25
    $region24: #{a2c_rollout.1} parent=1 // pred_region
      _
    $region25: #{a2c_rollout.1} parent=1 // pred_fallthru
      _
    // Predicated region
    $region26: #{a2c_rollout.1} parent=1 // pred_check
      _
    $region27: #{a2c_rollout.1} parent=1 // pred_check_branch
      %58 = sbr.rel (0) target = $region29
    $region28: #{a2c_rollout.1} parent=1 // pred_region
      _
    $region29: #{a2c_rollout.1} parent=1 // pred_fallthru
      _
    // Predicated region
    $region30: #{a2c_rollout.1} parent=1 // pred_check
      _
    $region31: #{a2c_rollout.1} parent=1 // pred_check_branch
      %60 = sbr.rel (0) target = $region33
    $region32: #{a2c_rollout.1} parent=1 // pred_region
      _
    $region33: #{a2c_rollout.1} parent=1 // pred_fallthru
      _
    // Predicated region
    $region34: #{a2c_rollout.1} parent=1 // pred_check
      _
    $region35: #{a2c_rollout.1} parent=1 // pred_check_branch
      %62 = sbr.rel (0) target = $region37
    $region36: #{a2c_rollout.1} parent=1 // pred_region
      %63 = dma.done [#allocation5], 1024
    $region37: #{a2c_rollout.1} parent=1 // pred_fallthru
      _
    // Predicated region
    $region38: #{a2c_rollout.1} parent=1 // pred_check
      _
    $region39: #{a2c_rollout.1} parent=1 // pred_check_branch
      %65 = sbr.rel (0) target = $region41
    $region40: #{a2c_rollout.1} parent=1 // pred_region
      %66 = dma.done [#allocation7], 256
    $region41: #{a2c_rollout.1} parent=1 // pred_fallthru
      _
    // Predicated region
    $region42: #{a2c_rollout.1} parent=1 // pred_check
      _
    $region43: #{a2c_rollout.1} parent=1 // pred_check_branch
      %68 = sbr.rel (0) target = $region45
    $region44: #{a2c_rollout.1} parent=1 // pred_region
      %69 = dma.done [#allocation7], 512
    $region45: #{a2c_rollout.1} parent=1 // pred_fallthru
      _
    %v70 = vld [vmem:[#allocation4] sm:$0xff]
    %v71 = vld [vmem:[#allocation4 + $0x8] sm:$0xff]
    %v72 = vld [vmem:[#allocation4 + $0x10] sm:$0xff]
    %v73 = vld [vmem:[#allocation4 + $0x18] sm:$0xff]
    %v74 = vld [vmem:[#allocation4 + $0x20] sm:$0xff]
    %v75 = vld [vmem:[#allocation4 + $0x28] sm:$0xff]
    %v76 = vld [vmem:[#allocation4 + $0x30] sm:$0xff]
    %v77 = vld [vmem:[#allocation4 + $0x38] sm:$0xff]
    %v78 = vld [vmem:[#allocation6] sm:$0xff]
    %v79 = vld [vmem:[#allocation6 + $0x8] sm:$0xff]
    %vm80 = vcmask 130048
    %v82 = vsel %vm80, %v70, 0
    %v85 = vsel %vm80, %v71, 0
    %v88 = vsel %vm80, %v72, 0
    %v91 = vsel %vm80, %v73, 0
    %v94 = vsel %vm80, %v74, 0
    %v97 = vsel %vm80, %v75, 0
    %v100 = vsel %vm80, %v76, 0
    %v103 = vsel %vm80, %v77, 0
    %105 = vmatprep.subr.mxu0 0.0
    %106 = vmatpush1.msra.mxu0 0.0
    %107 = vmatprep.subr.mxu0 0.0
    %108 = vmatpush1.msra.mxu0 0.0
    %109 = vmatprep.subr.mxu0 0.0
    %110 = vmatpush1.msra.mxu0 0.0
    %111 = vmatprep.subr.mxu0 0.0
    %112 = vmatpush1.msra.mxu0 0.0
    %113 = vmatprep.subr.mxu0 0.0
    %114 = vmatpush1.msra.mxu0 0.0
    %115 = vmatprep.subr.mxu0 0.0
    %116 = vmatpush1.msra.mxu0 0.0
    %117 = vmatprep.subr.mxu0 0.0
    %118 = vmatpush1.msra.mxu0 0.0
    %119 = vmatprep.subr.mxu0 0.0
    %120 = vmatpush1.msra.mxu0 0.0
    %121 = vmatprep.subr.mxu0 0.0
    %122 = vmatpush1.msra.mxu0 0.0
    %123 = vmatprep.subr.mxu0 0.0
    %124 = vmatpush1.msra.mxu0 0.0
    %125 = vmatprep.subr.mxu0 0.0
    %126 = vmatpush1.msra.mxu0 0.0
    %127 = vmatprep.subr.mxu0 0.0
    %128 = vmatpush1.msra.mxu0 0.0
    %129 = vmatprep.subr.mxu0 0.0
    %130 = vmatpush1.msra.mxu0 0.0
    %131 = vmatprep.subr.mxu0 0.0
    %132 = vmatpush1.msra.mxu0 0.0
    %133 = vmatprep.subr.mxu0 0.0
    %134 = vmatpush1.msra.mxu0 %v79
    %135 = vmatprep.subr.mxu0 0.0
    %136 = vmatpush1.msra.mxu0 %v78
    %137 = vmatprep.subr.mxu0 0.0
    %138 = vmatpush2.msra.mxu0 0.0
    %139 = vmatprep.subr.mxu0 0.0
    %140 = vmatpush2.msra.mxu0 0.0
    %141 = vmatprep.subr.mxu0 0.0
    %142 = vmatpush2.msra.mxu0 0.0
    %143 = vmatprep.subr.mxu0 0.0
    %144 = vmatpush2.msra.mxu0 0.0
    %145 = vmatprep.subr.mxu0 0.0
    %146 = vmatpush2.msra.mxu0 0.0
    %147 = vmatprep.subr.mxu0 0.0
    %148 = vmatpush2.msra.mxu0 0.0
    %149 = vmatprep.subr.mxu0 0.0
    %150 = vmatpush2.msra.mxu0 0.0
    %151 = vmatprep.subr.mxu0 0.0
    %152 = vmatpush2.msra.mxu0 0.0
    %153 = vmatprep.subr.mxu0 0.0
    %154 = vmatpush2.msra.mxu0 0.0
    %155 = vmatprep.subr.mxu0 0.0
    %156 = vmatpush2.msra.mxu0 0.0
    %157 = vmatprep.subr.mxu0 0.0
    %158 = vmatpush2.msra.mxu0 0.0
    %159 = vmatprep.subr.mxu0 0.0
    %160 = vmatpush2.msra.mxu0 0.0
    %161 = vmatprep.subr.mxu0 0.0
    %162 = vmatpush2.msra.mxu0 0.0
    %163 = vmatprep.subr.mxu0 0.0
    %164 = vmatpush2.msra.mxu0 0.0
    %165 = vmatprep.subr.mxu0 0.0
    %166 = vmatpush2.msra.mxu0 0.0
    %167 = vmatprep.subr.mxu0 0.0
    %168 = vmatpush2.msra.mxu0 0.0
    %169 = vmatprep.mubr.f32.mxu0 0.0
    %170 = vmatmul.mubr.f32.gmra.mxu0 %v82
    %v171 = vpop.f32.mrf.mxu0
    %v172 = vadd.f32 0.0, %v171
    %v173 = vpop.f32.mrf.mxu0
    %174 = vmatprep.mubr.f32.mxu0 0.0
    %175 = vmatmul.mubr.f32.gmra.mxu0 %v85
    %v176 = vpop.f32.mrf.mxu0
    %v177 = vadd.f32 0.0, %v176
    %v178 = vpop.f32.mrf.mxu0
    %179 = vmatprep.mubr.f32.mxu0 0.0
    %180 = vmatmul.mubr.f32.gmra.mxu0 %v88
    %v181 = vpop.f32.mrf.mxu0
    %v182 = vadd.f32 0.0, %v181
    %v183 = vpop.f32.mrf.mxu0
    %184 = vmatprep.mubr.f32.mxu0 0.0
    %185 = vmatmul.mubr.f32.gmra.mxu0 %v91
    %v186 = vpop.f32.mrf.mxu0
    %v187 = vadd.f32 0.0, %v186
    %v188 = vpop.f32.mrf.mxu0
    %189 = vmatprep.mubr.f32.mxu0 0.0
    %190 = vmatmul.mubr.f32.gmra.mxu0 %v94
    %v191 = vpop.f32.mrf.mxu0
    %v192 = vadd.f32 0.0, %v191
    %v193 = vpop.f32.mrf.mxu0
    %194 = vmatprep.mubr.f32.mxu0 0.0
    %195 = vmatmul.mubr.f32.gmra.mxu0 %v97
    %v196 = vpop.f32.mrf.mxu0
    %v197 = vadd.f32 0.0, %v196
    %v198 = vpop.f32.mrf.mxu0
    %199 = vmatprep.mubr.f32.mxu0 0.0
    %200 = vmatmul.mubr.f32.gmra.mxu0 %v100
    %v201 = vpop.f32.mrf.mxu0
    %v202 = vadd.f32 0.0, %v201
    %v203 = vpop.f32.mrf.mxu0
    %204 = vmatprep.mubr.f32.mxu0 0.0
    %205 = vmatmul.mubr.f32.gmra.mxu0 %v103
    %v206 = vpop.f32.mrf.mxu0
    %v207 = vadd.f32 0.0, %v206
    %v208 = vpop.f32.mrf.mxu0
    %209 = vdwg.mxu0
    %v210 = vmax.f32 %v172, 0.0
    %v211 = vmax.f32 %v177, 0.0
    %v212 = vmax.f32 %v182, 0.0
    %v213 = vmax.f32 %v187, 0.0
    %v214 = vmax.f32 %v192, 0.0
    %v215 = vmax.f32 %v197, 0.0
    %v216 = vmax.f32 %v202, 0.0
    %v217 = vmax.f32 %v207, 0.0
    %v218 = vld [vmem:[%s3] sm:$0xff]
    %v219 = vld [vmem:[%s3 + $0x8] sm:$0xff]
    %v220 = vld [vmem:[%s3 + $0x10] sm:$0xff]
    %v221 = vld [vmem:[%s3 + $0x18] sm:$0xff]
    %v222 = vld [vmem:[%s5] sm:$0x1]
    %v224 = vlaneseq
    %v225 = vshrl.u32 %v224, 7
    %v226 = vsub.s32 0, %v225
    %v227 = vrot.slane %v222, %v226
    %vm229 = vcmask 261120
    %v231 = vsel %vm229, %v210, 0
    %v234 = vsel %vm229, %v211, 0
    %v237 = vsel %vm229, %v212, 0
    %v240 = vsel %vm229, %v213, 0
    %v243 = vsel %vm229, %v214, 0
    %v246 = vsel %vm229, %v215, 0
    %v249 = vsel %vm229, %v216, 0
    %v252 = vsel %vm229, %v217, 0
    %254 = vmatprep.subr.mxu0 0.0
    %255 = vmatpush1.msra.mxu0 0.0
    %256 = vmatprep.subr.mxu0 0.0
    %257 = vmatpush1.msra.mxu0 0.0
    %258 = vmatprep.subr.mxu0 0.0
    %259 = vmatpush1.msra.mxu0 0.0
    %260 = vmatprep.subr.mxu0 0.0
    %261 = vmatpush1.msra.mxu0 0.0
    %262 = vmatprep.subr.mxu0 0.0
    %263 = vmatpush1.msra.mxu0 0.0
    %264 = vmatprep.subr.mxu0 0.0
    %265 = vmatpush1.msra.mxu0 0.0
    %266 = vmatprep.subr.mxu0 0.0
    %267 = vmatpush1.msra.mxu0 0.0
    %268 = vmatprep.subr.mxu0 0.0
    %269 = vmatpush1.msra.mxu0 0.0
    %270 = vmatprep.subr.mxu0 0.0
    %271 = vmatpush1.msra.mxu0 0.0
    %272 = vmatprep.subr.mxu0 0.0
    %273 = vmatpush1.msra.mxu0 0.0
    %274 = vmatprep.subr.mxu0 0.0
    %275 = vmatpush1.msra.mxu0 0.0
    %276 = vmatprep.subr.mxu0 0.0
    %277 = vmatpush1.msra.mxu0 0.0
    %278 = vmatprep.subr.mxu0 0.0
    %279 = vmatpush1.msra.mxu0 %v221
    %280 = vmatprep.subr.mxu0 0.0
    %281 = vmatpush1.msra.mxu0 %v220
    %282 = vmatprep.subr.mxu0 0.0
    %283 = vmatpush1.msra.mxu0 %v219
    %284 = vmatprep.subr.mxu0 0.0
    %285 = vmatpush1.msra.mxu0 %v218
    %286 = vmatprep.subr.mxu0 0.0
    %287 = vmatpush2.msra.mxu0 0.0
    %288 = vmatprep.subr.mxu0 0.0
    %289 = vmatpush2.msra.mxu0 0.0
    %290 = vmatprep.subr.mxu0 0.0
    %291 = vmatpush2.msra.mxu0 0.0
    %292 = vmatprep.subr.mxu0 0.0
    %293 = vmatpush2.msra.mxu0 0.0
    %294 = vmatprep.subr.mxu0 0.0
    %295 = vmatpush2.msra.mxu0 0.0
    %296 = vmatprep.subr.mxu0 0.0
    %297 = vmatpush2.msra.mxu0 0.0
    %298 = vmatprep.subr.mxu0 0.0
    %299 = vmatpush2.msra.mxu0 0.0
    %300 = vmatprep.subr.mxu0 0.0
    %301 = vmatpush2.msra.mxu0 0.0
    %302 = vmatprep.subr.mxu0 0.0
    %303 = vmatpush2.msra.mxu0 0.0
    %304 = vmatprep.subr.mxu0 0.0
    %305 = vmatpush2.msra.mxu0 0.0
    %306 = vmatprep.subr.mxu0 0.0
    %307 = vmatpush2.msra.mxu0 0.0
    %308 = vmatprep.subr.mxu0 0.0
    %309 = vmatpush2.msra.mxu0 0.0
    %310 = vmatprep.subr.mxu0 0.0
    %311 = vmatpush2.msra.mxu0 0.0
    %312 = vmatprep.subr.mxu0 0.0
    %313 = vmatpush2.msra.mxu0 0.0
    %314 = vmatprep.subr.mxu0 0.0
    %315 = vmatpush2.msra.mxu0 0.0
    %316 = vmatprep.subr.mxu0 0.0
    %317 = vmatpush2.msra.mxu0 0.0
    %318 = vmatprep.mubr.f32.mxu0 0.0
    %319 = vmatmul.mubr.f32.gmra.mxu0 %v231
    %v320 = vpop.f32.mrf.mxu0
    %v321 = vadd.f32 %v227, %v320
    %v322 = vpop.f32.mrf.mxu0
    %323 = vmatprep.mubr.f32.mxu0 0.0
    %324 = vmatmul.mubr.f32.gmra.mxu0 %v234
    %v325 = vpop.f32.mrf.mxu0
    %v326 = vadd.f32 %v227, %v325
    %v327 = vpop.f32.mrf.mxu0
    %328 = vmatprep.mubr.f32.mxu0 0.0
    %329 = vmatmul.mubr.f32.gmra.mxu0 %v237
    %v330 = vpop.f32.mrf.mxu0
    %v331 = vadd.f32 %v227, %v330
    %v332 = vpop.f32.mrf.mxu0
    %333 = vmatprep.mubr.f32.mxu0 0.0
    %334 = vmatmul.mubr.f32.gmra.mxu0 %v240
    %v335 = vpop.f32.mrf.mxu0
    %v336 = vadd.f32 %v227, %v335
    %v337 = vpop.f32.mrf.mxu0
    %338 = vmatprep.mubr.f32.mxu0 0.0
    %339 = vmatmul.mubr.f32.gmra.mxu0 %v243
    %v340 = vpop.f32.mrf.mxu0
    %v341 = vadd.f32 %v227, %v340
    %v342 = vpop.f32.mrf.mxu0
    %343 = vmatprep.mubr.f32.mxu0 0.0
    %344 = vmatmul.mubr.f32.gmra.mxu0 %v246
    %v345 = vpop.f32.mrf.mxu0
    %v346 = vadd.f32 %v227, %v345
    %v347 = vpop.f32.mrf.mxu0
    %348 = vmatprep.mubr.f32.mxu0 0.0
    %349 = vmatmul.mubr.f32.gmra.mxu0 %v249
    %v350 = vpop.f32.mrf.mxu0
    %v351 = vadd.f32 %v227, %v350
    %v352 = vpop.f32.mrf.mxu0
    %353 = vmatprep.mubr.f32.mxu0 0.0
    %354 = vmatmul.mubr.f32.gmra.mxu0 %v252
    %v355 = vpop.f32.mrf.mxu0
    %v356 = vadd.f32 %v227, %v355
    %v357 = vpop.f32.mrf.mxu0
    %358 = vdwg.mxu0
    %359 = vst [vmem:[#allocation2] sm:$0xff] %v321
    %360 = vst [vmem:[#allocation2 + $0x8] sm:$0xff] %v326
    %361 = vst [vmem:[#allocation2 + $0x10] sm:$0xff] %v331
    %362 = vst [vmem:[#allocation2 + $0x18] sm:$0xff] %v336
    %363 = vst [vmem:[#allocation2 + $0x20] sm:$0xff] %v341
    %364 = vst [vmem:[#allocation2 + $0x28] sm:$0xff] %v346
    %365 = vst [vmem:[#allocation2 + $0x30] sm:$0xff] %v351
    %366 = vst [vmem:[#allocation2 + $0x38] sm:$0xff] %v356
    %v367 = vld [vmem:[#allocation8] sm:$0xff]
    %v368 = vld [vmem:[#allocation8 + $0x8] sm:$0xff]
    %v369 = vld [vmem:[#allocation8 + $0x10] sm:$0xff]
    %v370 = vld [vmem:[#allocation8 + $0x18] sm:$0xff]
    %v371 = vld [vmem:[%s1] sm:$0xff]
    %v372 = vld [vmem:[#allocation2] sm:$0xff]
    %v374 = vsel %vm229, %v371, 0
    %376 = vmatprep.subr.mxu0 0.0
    %377 = vmatpush1.msra.mxu0 0.0
    %378 = vmatprep.subr.mxu0 0.0
    %379 = vmatpush1.msra.mxu0 0.0
    %380 = vmatprep.subr.mxu0 0.0
    %381 = vmatpush1.msra.mxu0 0.0
    %382 = vmatprep.subr.mxu0 0.0
    %383 = vmatpush1.msra.mxu0 0.0
    %384 = vmatprep.subr.mxu0 0.0
    %385 = vmatpush1.msra.mxu0 0.0
    %386 = vmatprep.subr.mxu0 0.0
    %387 = vmatpush1.msra.mxu0 0.0
    %388 = vmatprep.subr.mxu0 0.0
    %389 = vmatpush1.msra.mxu0 0.0
    %390 = vmatprep.subr.mxu0 0.0
    %391 = vmatpush1.msra.mxu0 0.0
    %392 = vmatprep.subr.mxu0 0.0
    %393 = vmatpush1.msra.mxu0 0.0
    %394 = vmatprep.subr.mxu0 0.0
    %395 = vmatpush1.msra.mxu0 0.0
    %396 = vmatprep.subr.mxu0 0.0
    %397 = vmatpush1.msra.mxu0 0.0
    %398 = vmatprep.subr.mxu0 0.0
    %399 = vmatpush1.msra.mxu0 0.0
    %400 = vmatprep.subr.mxu0 0.0
    %401 = vmatpush1.msra.mxu0 %v370
    %402 = vmatprep.subr.mxu0 0.0
    %403 = vmatpush1.msra.mxu0 %v369
    %404 = vmatprep.subr.mxu0 0.0
    %405 = vmatpush1.msra.mxu0 %v368
    %406 = vmatprep.subr.mxu0 0.0
    %407 = vmatpush1.msra.mxu0 %v367
    %408 = vmatprep.subr.mxu0 0.0
    %409 = vmatpush2.msra.mxu0 0.0
    %410 = vmatprep.subr.mxu0 0.0
    %411 = vmatpush2.msra.mxu0 0.0
    %412 = vmatprep.subr.mxu0 0.0
    %413 = vmatpush2.msra.mxu0 0.0
    %414 = vmatprep.subr.mxu0 0.0
    %415 = vmatpush2.msra.mxu0 0.0
    %416 = vmatprep.subr.mxu0 0.0
    %417 = vmatpush2.msra.mxu0 0.0
    %418 = vmatprep.subr.mxu0 0.0
    %419 = vmatpush2.msra.mxu0 0.0
    %420 = vmatprep.subr.mxu0 0.0
    %421 = vmatpush2.msra.mxu0 0.0
    %422 = vmatprep.subr.mxu0 0.0
    %423 = vmatpush2.msra.mxu0 0.0
    %424 = vmatprep.subr.mxu0 0.0
    %425 = vmatpush2.msra.mxu0 0.0
    %426 = vmatprep.subr.mxu0 0.0
    %427 = vmatpush2.msra.mxu0 0.0
    %428 = vmatprep.subr.mxu0 0.0
    %429 = vmatpush2.msra.mxu0 0.0
    %430 = vmatprep.subr.mxu0 0.0
    %431 = vmatpush2.msra.mxu0 0.0
    %432 = vmatprep.subr.mxu0 0.0
    %433 = vmatpush2.msra.mxu0 0.0
    %434 = vmatprep.subr.mxu0 0.0
    %435 = vmatpush2.msra.mxu0 0.0
    %436 = vmatprep.subr.mxu0 0.0
    %437 = vmatpush2.msra.mxu0 0.0
    %438 = vmatprep.subr.mxu0 0.0
    %439 = vmatpush2.msra.mxu0 0.0
    %440 = vmatprep.mubr.f32.mxu0 0.0
    %441 = vmatmul.mubr.f32.gmra.mxu0 %v374
    %v442 = vpop.f32.mrf.mxu0
    %v443 = vadd.f32 0.0, %v442
    %v444 = vpop.f32.mrf.mxu0
    %445 = vdwg.mxu0
    %v446 = vadd.f32 %v372, %v443
    %v447 = vxor.u32 %v446, 2147483648
    %v448 = vmul.f32 %v447, 1.442695
    %v449 = vpow.pop %v448
    %v450 = vadd.f32 %v449, 1.0
    %v451 = vrcp.pop %v450
    %v452 = vmul.f32 1.0, %v451
    %454 = vrot.lane.b32.xlu0 %v446, 32
    %v455 = vpop.permute.xlu0 %454
    %v457 = vmul.f32 %v452, %v455
    %459 = vrot.lane.b32.xlu0 %v457, 64
    %v460 = vpop.permute.xlu0 %459
    %v462 = vadd.f32 %v446, %v460
    %v463 = vtanh.pop %v462
    %v464 = vsub.f32 1.0, %v452
    %466 = vrot.lane.b32.xlu0 %v463, 96
    %v467 = vpop.permute.xlu0 %466
    %v469 = vmul.f32 %v464, %v467
    %470 = vrot.lane.b32.xlu0 %v371, 32
    %v471 = vpop.permute.xlu0 %470
    %v473 = vmul.f32 %v452, %v471
    %v474 = vadd.f32 %v469, %v473
    %476 = vrot.lane.b32.xlu0 %v474, 96
    %v477 = vpop.permute.xlu0 %476
    %479 = vst.msk [vmem:[#allocation3] sm:$0xff] %vm229, %v477
    %s480 = scalar_lea.vmem [#allocation2], 8
    %v481 = vld [vmem:[%s480] sm:$0xff]
    %v482 = vsel %vm229, %v477, 0
    %484 = vmatprep.subr.mxu0 0.0
    %485 = vmatpush1.msra.mxu0 0.0
    %486 = vmatprep.subr.mxu0 0.0
    %487 = vmatpush1.msra.mxu0 0.0
    %488 = vmatprep.subr.mxu0 0.0
    %489 = vmatpush1.msra.mxu0 0.0
    %490 = vmatprep.subr.mxu0 0.0
    %491 = vmatpush1.msra.mxu0 0.0
    %492 = vmatprep.subr.mxu0 0.0
    %493 = vmatpush1.msra.mxu0 0.0
    %494 = vmatprep.subr.mxu0 0.0
    %495 = vmatpush1.msra.mxu0 0.0
    %496 = vmatprep.subr.mxu0 0.0
    %497 = vmatpush1.msra.mxu0 0.0
    %498 = vmatprep.subr.mxu0 0.0
    %499 = vmatpush1.msra.mxu0 0.0
    %500 = vmatprep.subr.mxu0 0.0
    %501 = vmatpush1.msra.mxu0 0.0
    %502 = vmatprep.subr.mxu0 0.0
    %503 = vmatpush1.msra.mxu0 0.0
    %504 = vmatprep.subr.mxu0 0.0
    %505 = vmatpush1.msra.mxu0 0.0
    %506 = vmatprep.subr.mxu0 0.0
    %507 = vmatpush1.msra.mxu0 0.0
    %508 = vmatprep.subr.mxu0 0.0
    %509 = vmatpush1.msra.mxu0 %v370
    %510 = vmatprep.subr.mxu0 0.0
    %511 = vmatpush1.msra.mxu0 %v369
    %512 = vmatprep.subr.mxu0 0.0
    %513 = vmatpush1.msra.mxu0 %v368
    %514 = vmatprep.subr.mxu0 0.0
    %515 = vmatpush1.msra.mxu0 %v367
    %516 = vmatprep.subr.mxu0 0.0
    %517 = vmatpush2.msra.mxu0 0.0
    %518 = vmatprep.subr.mxu0 0.0
    %519 = vmatpush2.msra.mxu0 0.0
    %520 = vmatprep.subr.mxu0 0.0
    %521 = vmatpush2.msra.mxu0 0.0
    %522 = vmatprep.subr.mxu0 0.0
    %523 = vmatpush2.msra.mxu0 0.0
    %524 = vmatprep.subr.mxu0 0.0
    %525 = vmatpush2.msra.mxu0 0.0
    %526 = vmatprep.subr.mxu0 0.0
    %527 = vmatpush2.msra.mxu0 0.0
    %528 = vmatprep.subr.mxu0 0.0
    %529 = vmatpush2.msra.mxu0 0.0
    %530 = vmatprep.subr.mxu0 0.0
    %531 = vmatpush2.msra.mxu0 0.0
    %532 = vmatprep.subr.mxu0 0.0
    %533 = vmatpush2.msra.mxu0 0.0
    %534 = vmatprep.subr.mxu0 0.0
    %535 = vmatpush2.msra.mxu0 0.0
    %536 = vmatprep.subr.mxu0 0.0
    %537 = vmatpush2.msra.mxu0 0.0
    %538 = vmatprep.subr.mxu0 0.0
    %539 = vmatpush2.msra.mxu0 0.0
    %540 = vmatprep.subr.mxu0 0.0
    %541 = vmatpush2.msra.mxu0 0.0
    %542 = vmatprep.subr.mxu0 0.0
    %543 = vmatpush2.msra.mxu0 0.0
    %544 = vmatprep.subr.mxu0 0.0
    %545 = vmatpush2.msra.mxu0 0.0
    %546 = vmatprep.subr.mxu0 0.0
    %547 = vmatpush2.msra.mxu0 0.0
    %548 = vmatprep.mubr.f32.mxu0 0.0
    %549 = vmatmul.mubr.f32.gmra.mxu0 %v482
    %v550 = vpop.f32.mrf.mxu0
    %v551 = vadd.f32 0.0, %v550
    %v552 = vpop.f32.mrf.mxu0
    %553 = vdwg.mxu0
    %v554 = vadd.f32 %v481, %v551
    %v555 = vxor.u32 %v554, 2147483648
    %v556 = vmul.f32 %v555, 1.442695
    %v557 = vpow.pop %v556
    %v558 = vadd.f32 %v557, 1.0
    %v559 = vrcp.pop %v558
    %v560 = vmul.f32 1.0, %v559
    %562 = vrot.lane.b32.xlu0 %v554, 32
    %v563 = vpop.permute.xlu0 %562
    %v565 = vmul.f32 %v560, %v563
    %567 = vrot.lane.b32.xlu0 %v565, 64
    %v568 = vpop.permute.xlu0 %567
    %v570 = vadd.f32 %v554, %v568
    %v571 = vtanh.pop %v570
    %v572 = vsub.f32 1.0, %v560
    %574 = vrot.lane.b32.xlu0 %v571, 96
    %v575 = vpop.permute.xlu0 %574
    %v577 = vmul.f32 %v572, %v575
    %v578 = vmul.f32 %v560, %v474
    %v579 = vadd.f32 %v577, %v578
    %581 = vrot.lane.b32.xlu0 %v579, 96
    %v582 = vpop.permute.xlu0 %581
    %s584 = scalar_lea.vmem [#allocation3], 8
    %585 = vst.msk [vmem:[%s584] sm:$0xff] %vm229, %v582
    %s586 = scalar_lea.vmem [#allocation2], 16
    %v587 = vld [vmem:[%s586] sm:$0xff]
    %v588 = vsel %vm229, %v582, 0
    %590 = vmatprep.subr.mxu0 0.0
    %591 = vmatpush1.msra.mxu0 0.0
    %592 = vmatprep.subr.mxu0 0.0
    %593 = vmatpush1.msra.mxu0 0.0
    %594 = vmatprep.subr.mxu0 0.0
    %595 = vmatpush1.msra.mxu0 0.0
    %596 = vmatprep.subr.mxu0 0.0
    %597 = vmatpush1.msra.mxu0 0.0
    %598 = vmatprep.subr.mxu0 0.0
    %599 = vmatpush1.msra.mxu0 0.0
    %600 = vmatprep.subr.mxu0 0.0
    %601 = vmatpush1.msra.mxu0 0.0
    %602 = vmatprep.subr.mxu0 0.0
    %603 = vmatpush1.msra.mxu0 0.0
    %604 = vmatprep.subr.mxu0 0.0
    %605 = vmatpush1.msra.mxu0 0.0
    %606 = vmatprep.subr.mxu0 0.0
    %607 = vmatpush1.msra.mxu0 0.0
    %608 = vmatprep.subr.mxu0 0.0
    %609 = vmatpush1.msra.mxu0 0.0
    %610 = vmatprep.subr.mxu0 0.0
    %611 = vmatpush1.msra.mxu0 0.0
    %612 = vmatprep.subr.mxu0 0.0
    %613 = vmatpush1.msra.mxu0 0.0
    %614 = vmatprep.subr.mxu0 0.0
    %615 = vmatpush1.msra.mxu0 %v370
    %616 = vmatprep.subr.mxu0 0.0
    %617 = vmatpush1.msra.mxu0 %v369
    %618 = vmatprep.subr.mxu0 0.0
    %619 = vmatpush1.msra.mxu0 %v368
    %620 = vmatprep.subr.mxu0 0.0
    %621 = vmatpush1.msra.mxu0 %v367
    %622 = vmatprep.subr.mxu0 0.0
    %623 = vmatpush2.msra.mxu0 0.0
    %624 = vmatprep.subr.mxu0 0.0
    %625 = vmatpush2.msra.mxu0 0.0
    %626 = vmatprep.subr.mxu0 0.0
    %627 = vmatpush2.msra.mxu0 0.0
    %628 = vmatprep.subr.mxu0 0.0
    %629 = vmatpush2.msra.mxu0 0.0
    %630 = vmatprep.subr.mxu0 0.0
    %631 = vmatpush2.msra.mxu0 0.0
    %632 = vmatprep.subr.mxu0 0.0
    %633 = vmatpush2.msra.mxu0 0.0
    %634 = vmatprep.subr.mxu0 0.0
    %635 = vmatpush2.msra.mxu0 0.0
    %636 = vmatprep.subr.mxu0 0.0
    %637 = vmatpush2.msra.mxu0 0.0
    %638 = vmatprep.subr.mxu0 0.0
    %639 = vmatpush2.msra.mxu0 0.0
    %640 = vmatprep.subr.mxu0 0.0
    %641 = vmatpush2.msra.mxu0 0.0
    %642 = vmatprep.subr.mxu0 0.0
    %643 = vmatpush2.msra.mxu0 0.0
    %644 = vmatprep.subr.mxu0 0.0
    %645 = vmatpush2.msra.mxu0 0.0
    %646 = vmatprep.subr.mxu0 0.0
    %647 = vmatpush2.msra.mxu0 0.0
    %648 = vmatprep.subr.mxu0 0.0
    %649 = vmatpush2.msra.mxu0 0.0
    %650 = vmatprep.subr.mxu0 0.0
    %651 = vmatpush2.msra.mxu0 0.0
    %652 = vmatprep.subr.mxu0 0.0
    %653 = vmatpush2.msra.mxu0 0.0
    %654 = vmatprep.mubr.f32.mxu0 0.0
    %655 = vmatmul.mubr.f32.gmra.mxu0 %v588
    %v656 = vpop.f32.mrf.mxu0
    %v657 = vadd.f32 0.0, %v656
    %v658 = vpop.f32.mrf.mxu0
    %659 = vdwg.mxu0
    %v660 = vadd.f32 %v587, %v657
    %v661 = vxor.u32 %v660, 2147483648
    %v662 = vmul.f32 %v661, 1.442695
    %v663 = vpow.pop %v662
    %v664 = vadd.f32 %v663, 1.0
    %v665 = vrcp.pop %v664
    %v666 = vmul.f32 1.0, %v665
    %668 = vrot.lane.b32.xlu0 %v660, 32
    %v669 = vpop.permute.xlu0 %668
    %v671 = vmul.f32 %v666, %v669
    %673 = vrot.lane.b32.xlu0 %v671, 64
    %v674 = vpop.permute.xlu0 %673
    %v676 = vadd.f32 %v660, %v674
    %v677 = vtanh.pop %v676
    %v678 = vsub.f32 1.0, %v666
    %680 = vrot.lane.b32.xlu0 %v677, 96
    %v681 = vpop.permute.xlu0 %680
    %v683 = vmul.f32 %v678, %v681
    %v684 = vmul.f32 %v666, %v579
    %v685 = vadd.f32 %v683, %v684
    %687 = vrot.lane.b32.xlu0 %v685, 96
    %v688 = vpop.permute.xlu0 %687
    %s690 = scalar_lea.vmem [#allocation3], 16
    %691 = vst.msk [vmem:[%s690] sm:$0xff] %vm229, %v688
    %s692 = scalar_lea.vmem [#allocation2], 24
    %v693 = vld [vmem:[%s692] sm:$0xff]
    %v694 = vsel %vm229, %v688, 0
    %696 = vmatprep.subr.mxu0 0.0
    %697 = vmatpush1.msra.mxu0 0.0
    %698 = vmatprep.subr.mxu0 0.0
    %699 = vmatpush1.msra.mxu0 0.0
    %700 = vmatprep.subr.mxu0 0.0
    %701 = vmatpush1.msra.mxu0 0.0
    %702 = vmatprep.subr.mxu0 0.0
    %703 = vmatpush1.msra.mxu0 0.0
    %704 = vmatprep.subr.mxu0 0.0
    %705 = vmatpush1.msra.mxu0 0.0
    %706 = vmatprep.subr.mxu0 0.0
    %707 = vmatpush1.msra.mxu0 0.0
    %708 = vmatprep.subr.mxu0 0.0
    %709 = vmatpush1.msra.mxu0 0.0
    %710 = vmatprep.subr.mxu0 0.0
    %711 = vmatpush1.msra.mxu0 0.0
    %712 = vmatprep.subr.mxu0 0.0
    %713 = vmatpush1.msra.mxu0 0.0
    %714 = vmatprep.subr.mxu0 0.0
    %715 = vmatpush1.msra.mxu0 0.0
    %716 = vmatprep.subr.mxu0 0.0
    %717 = vmatpush1.msra.mxu0 0.0
    %718 = vmatprep.subr.mxu0 0.0
    %719 = vmatpush1.msra.mxu0 0.0
    %720 = vmatprep.subr.mxu0 0.0
    %721 = vmatpush1.msra.mxu0 %v370
    %722 = vmatprep.subr.mxu0 0.0
    %723 = vmatpush1.msra.mxu0 %v369
    %724 = vmatprep.subr.mxu0 0.0
    %725 = vmatpush1.msra.mxu0 %v368
    %726 = vmatprep.subr.mxu0 0.0
    %727 = vmatpush1.msra.mxu0 %v367
    %728 = vmatprep.subr.mxu0 0.0
    %729 = vmatpush2.msra.mxu0 0.0
    %730 = vmatprep.subr.mxu0 0.0
    %731 = vmatpush2.msra.mxu0 0.0
    %732 = vmatprep.subr.mxu0 0.0
    %733 = vmatpush2.msra.mxu0 0.0
    %734 = vmatprep.subr.mxu0 0.0
    %735 = vmatpush2.msra.mxu0 0.0
    %736 = vmatprep.subr.mxu0 0.0
    %737 = vmatpush2.msra.mxu0 0.0
    %738 = vmatprep.subr.mxu0 0.0
    %739 = vmatpush2.msra.mxu0 0.0
    %740 = vmatprep.subr.mxu0 0.0
    %741 = vmatpush2.msra.mxu0 0.0
    %742 = vmatprep.subr.mxu0 0.0
    %743 = vmatpush2.msra.mxu0 0.0
    %744 = vmatprep.subr.mxu0 0.0
    %745 = vmatpush2.msra.mxu0 0.0
    %746 = vmatprep.subr.mxu0 0.0
    %747 = vmatpush2.msra.mxu0 0.0
    %748 = vmatprep.subr.mxu0 0.0
    %749 = vmatpush2.msra.mxu0 0.0
    %750 = vmatprep.subr.mxu0 0.0
    %751 = vmatpush2.msra.mxu0 0.0
    %752 = vmatprep.subr.mxu0 0.0
    %753 = vmatpush2.msra.mxu0 0.0
    %754 = vmatprep.subr.mxu0 0.0
    %755 = vmatpush2.msra.mxu0 0.0
    %756 = vmatprep.subr.mxu0 0.0
    %757 = vmatpush2.msra.mxu0 0.0
    %758 = vmatprep.subr.mxu0 0.0
    %759 = vmatpush2.msra.mxu0 0.0
    %760 = vmatprep.mubr.f32.mxu0 0.0
    %761 = vmatmul.mubr.f32.gmra.mxu0 %v694
    %v762 = vpop.f32.mrf.mxu0
    %v763 = vadd.f32 0.0, %v762
    %v764 = vpop.f32.mrf.mxu0
    %765 = vdwg.mxu0
    %v766 = vadd.f32 %v693, %v763
    %v767 = vxor.u32 %v766, 2147483648
    %v768 = vmul.f32 %v767, 1.442695
    %v769 = vpow.pop %v768
    %v770 = vadd.f32 %v769, 1.0
    %v771 = vrcp.pop %v770
    %v772 = vmul.f32 1.0, %v771
    %774 = vrot.lane.b32.xlu0 %v766, 32
    %v775 = vpop.permute.xlu0 %774
    %v777 = vmul.f32 %v772, %v775
    %779 = vrot.lane.b32.xlu0 %v777, 64
    %v780 = vpop.permute.xlu0 %779
    %v782 = vadd.f32 %v766, %v780
    %v783 = vtanh.pop %v782
    %v784 = vsub.f32 1.0, %v772
    %786 = vrot.lane.b32.xlu0 %v783, 96
    %v787 = vpop.permute.xlu0 %786
    %v789 = vmul.f32 %v784, %v787
    %v790 = vmul.f32 %v772, %v685
    %v791 = vadd.f32 %v789, %v790
    %793 = vrot.lane.b32.xlu0 %v791, 96
    %v794 = vpop.permute.xlu0 %793
    %s796 = scalar_lea.vmem [#allocation3], 24
    %797 = vst.msk [vmem:[%s796] sm:$0xff] %vm229, %v794
    %s798 = scalar_lea.vmem [#allocation2], 32
    %v799 = vld [vmem:[%s798] sm:$0xff]
    %v800 = vsel %vm229, %v794, 0
    %802 = vmatprep.subr.mxu0 0.0
    %803 = vmatpush1.msra.mxu0 0.0
    %804 = vmatprep.subr.mxu0 0.0
    %805 = vmatpush1.msra.mxu0 0.0
    %806 = vmatprep.subr.mxu0 0.0
    %807 = vmatpush1.msra.mxu0 0.0
    %808 = vmatprep.subr.mxu0 0.0
    %809 = vmatpush1.msra.mxu0 0.0
    %810 = vmatprep.subr.mxu0 0.0
    %811 = vmatpush1.msra.mxu0 0.0
    %812 = vmatprep.subr.mxu0 0.0
    %813 = vmatpush1.msra.mxu0 0.0
    %814 = vmatprep.subr.mxu0 0.0
    %815 = vmatpush1.msra.mxu0 0.0
    %816 = vmatprep.subr.mxu0 0.0
    %817 = vmatpush1.msra.mxu0 0.0
    %818 = vmatprep.subr.mxu0 0.0
    %819 = vmatpush1.msra.mxu0 0.0
    %820 = vmatprep.subr.mxu0 0.0
    %821 = vmatpush1.msra.mxu0 0.0
    %822 = vmatprep.subr.mxu0 0.0
    %823 = vmatpush1.msra.mxu0 0.0
    %824 = vmatprep.subr.mxu0 0.0
    %825 = vmatpush1.msra.mxu0 0.0
    %826 = vmatprep.subr.mxu0 0.0
    %827 = vmatpush1.msra.mxu0 %v370
    %828 = vmatprep.subr.mxu0 0.0
    %829 = vmatpush1.msra.mxu0 %v369
    %830 = vmatprep.subr.mxu0 0.0
    %831 = vmatpush1.msra.mxu0 %v368
    %832 = vmatprep.subr.mxu0 0.0
    %833 = vmatpush1.msra.mxu0 %v367
    %834 = vmatprep.subr.mxu0 0.0
    %835 = vmatpush2.msra.mxu0 0.0
    %836 = vmatprep.subr.mxu0 0.0
    %837 = vmatpush2.msra.mxu0 0.0
    %838 = vmatprep.subr.mxu0 0.0
    %839 = vmatpush2.msra.mxu0 0.0
    %840 = vmatprep.subr.mxu0 0.0
    %841 = vmatpush2.msra.mxu0 0.0
    %842 = vmatprep.subr.mxu0 0.0
    %843 = vmatpush2.msra.mxu0 0.0
    %844 = vmatprep.subr.mxu0 0.0
    %845 = vmatpush2.msra.mxu0 0.0
    %846 = vmatprep.subr.mxu0 0.0
    %847 = vmatpush2.msra.mxu0 0.0
    %848 = vmatprep.subr.mxu0 0.0
    %849 = vmatpush2.msra.mxu0 0.0
    %850 = vmatprep.subr.mxu0 0.0
    %851 = vmatpush2.msra.mxu0 0.0
    %852 = vmatprep.subr.mxu0 0.0
    %853 = vmatpush2.msra.mxu0 0.0
    %854 = vmatprep.subr.mxu0 0.0
    %855 = vmatpush2.msra.mxu0 0.0
    %856 = vmatprep.subr.mxu0 0.0
    %857 = vmatpush2.msra.mxu0 0.0
    %858 = vmatprep.subr.mxu0 0.0
    %859 = vmatpush2.msra.mxu0 0.0
    %860 = vmatprep.subr.mxu0 0.0
    %861 = vmatpush2.msra.mxu0 0.0
    %862 = vmatprep.subr.mxu0 0.0
    %863 = vmatpush2.msra.mxu0 0.0
    %864 = vmatprep.subr.mxu0 0.0
    %865 = vmatpush2.msra.mxu0 0.0
    %866 = vmatprep.mubr.f32.mxu0 0.0
    %867 = vmatmul.mubr.f32.gmra.mxu0 %v800
    %v868 = vpop.f32.mrf.mxu0
    %v869 = vadd.f32 0.0, %v868
    %v870 = vpop.f32.mrf.mxu0
    %871 = vdwg.mxu0
    %v872 = vadd.f32 %v799, %v869
    %v873 = vxor.u32 %v872, 2147483648
    %v874 = vmul.f32 %v873, 1.442695
    %v875 = vpow.pop %v874
    %v876 = vadd.f32 %v875, 1.0
    %v877 = vrcp.pop %v876
    %v878 = vmul.f32 1.0, %v877
    %880 = vrot.lane.b32.xlu0 %v872, 32
    %v881 = vpop.permute.xlu0 %880
    %v883 = vmul.f32 %v878, %v881
    %885 = vrot.lane.b32.xlu0 %v883, 64
    %v886 = vpop.permute.xlu0 %885
    %v888 = vadd.f32 %v872, %v886
    %v889 = vtanh.pop %v888
    %v890 = vsub.f32 1.0, %v878
    %892 = vrot.lane.b32.xlu0 %v889, 96
    %v893 = vpop.permute.xlu0 %892
    %v895 = vmul.f32 %v890, %v893
    %v896 = vmul.f32 %v878, %v791
    %v897 = vadd.f32 %v895, %v896
    %899 = vrot.lane.b32.xlu0 %v897, 96
    %v900 = vpop.permute.xlu0 %899
    %s902 = scalar_lea.vmem [#allocation3], 32
    %903 = vst.msk [vmem:[%s902] sm:$0xff] %vm229, %v900
    %s904 = scalar_lea.vmem [#allocation2], 40
    %v905 = vld [vmem:[%s904] sm:$0xff]
    %v906 = vsel %vm229, %v900, 0
    %908 = vmatprep.subr.mxu0 0.0
    %909 = vmatpush1.msra.mxu0 0.0
    %910 = vmatprep.subr.mxu0 0.0
    %911 = vmatpush1.msra.mxu0 0.0
    %912 = vmatprep.subr.mxu0 0.0
    %913 = vmatpush1.msra.mxu0 0.0
    %914 = vmatprep.subr.mxu0 0.0
    %915 = vmatpush1.msra.mxu0 0.0
    %916 = vmatprep.subr.mxu0 0.0
    %917 = vmatpush1.msra.mxu0 0.0
    %918 = vmatprep.subr.mxu0 0.0
    %919 = vmatpush1.msra.mxu0 0.0
    %920 = vmatprep.subr.mxu0 0.0
    %921 = vmatpush1.msra.mxu0 0.0
    %922 = vmatprep.subr.mxu0 0.0
    %923 = vmatpush1.msra.mxu0 0.0
    %924 = vmatprep.subr.mxu0 0.0
    %925 = vmatpush1.msra.mxu0 0.0
    %926 = vmatprep.subr.mxu0 0.0
    %927 = vmatpush1.msra.mxu0 0.0
    %928 = vmatprep.subr.mxu0 0.0
    %929 = vmatpush1.msra.mxu0 0.0
    %930 = vmatprep.subr.mxu0 0.0
    %931 = vmatpush1.msra.mxu0 0.0
    %932 = vmatprep.subr.mxu0 0.0
    %933 = vmatpush1.msra.mxu0 %v370
    %934 = vmatprep.subr.mxu0 0.0
    %935 = vmatpush1.msra.mxu0 %v369
    %936 = vmatprep.subr.mxu0 0.0
    %937 = vmatpush1.msra.mxu0 %v368
    %938 = vmatprep.subr.mxu0 0.0
    %939 = vmatpush1.msra.mxu0 %v367
    %940 = vmatprep.subr.mxu0 0.0
    %941 = vmatpush2.msra.mxu0 0.0
    %942 = vmatprep.subr.mxu0 0.0
    %943 = vmatpush2.msra.mxu0 0.0
    %944 = vmatprep.subr.mxu0 0.0
    %945 = vmatpush2.msra.mxu0 0.0
    %946 = vmatprep.subr.mxu0 0.0
    %947 = vmatpush2.msra.mxu0 0.0
    %948 = vmatprep.subr.mxu0 0.0
    %949 = vmatpush2.msra.mxu0 0.0
    %950 = vmatprep.subr.mxu0 0.0
    %951 = vmatpush2.msra.mxu0 0.0
    %952 = vmatprep.subr.mxu0 0.0
    %953 = vmatpush2.msra.mxu0 0.0
    %954 = vmatprep.subr.mxu0 0.0
    %955 = vmatpush2.msra.mxu0 0.0
    %956 = vmatprep.subr.mxu0 0.0
    %957 = vmatpush2.msra.mxu0 0.0
    %958 = vmatprep.subr.mxu0 0.0
    %959 = vmatpush2.msra.mxu0 0.0
    %960 = vmatprep.subr.mxu0 0.0
    %961 = vmatpush2.msra.mxu0 0.0
    %962 = vmatprep.subr.mxu0 0.0
    %963 = vmatpush2.msra.mxu0 0.0
    %964 = vmatprep.subr.mxu0 0.0
    %965 = vmatpush2.msra.mxu0 0.0
    %966 = vmatprep.subr.mxu0 0.0
    %967 = vmatpush2.msra.mxu0 0.0
    %968 = vmatprep.subr.mxu0 0.0
    %969 = vmatpush2.msra.mxu0 0.0
    %970 = vmatprep.subr.mxu0 0.0
    %971 = vmatpush2.msra.mxu0 0.0
    %972 = vmatprep.mubr.f32.mxu0 0.0
    %973 = vmatmul.mubr.f32.gmra.mxu0 %v906
    %v974 = vpop.f32.mrf.mxu0
    %v975 = vadd.f32 0.0, %v974
    %v976 = vpop.f32.mrf.mxu0
    %977 = vdwg.mxu0
    %v978 = vadd.f32 %v905, %v975
    %v979 = vxor.u32 %v978, 2147483648
    %v980 = vmul.f32 %v979, 1.442695
    %v981 = vpow.pop %v980
    %v982 = vadd.f32 %v981, 1.0
    %v983 = vrcp.pop %v982
    %v984 = vmul.f32 1.0, %v983
    %986 = vrot.lane.b32.xlu0 %v978, 32
    %v987 = vpop.permute.xlu0 %986
    %v989 = vmul.f32 %v984, %v987
    %991 = vrot.lane.b32.xlu0 %v989, 64
    %v992 = vpop.permute.xlu0 %991
    %v994 = vadd.f32 %v978, %v992
    %v995 = vtanh.pop %v994
    %v996 = vsub.f32 1.0, %v984
    %998 = vrot.lane.b32.xlu0 %v995, 96
    %v999 = vpop.permute.xlu0 %998
    %v1001 = vmul.f32 %v996, %v999
    %v1002 = vmul.f32 %v984, %v897
    %v1003 = vadd.f32 %v1001, %v1002
    %1005 = vrot.lane.b32.xlu0 %v1003, 96
    %v1006 = vpop.permute.xlu0 %1005
    %s1008 = scalar_lea.vmem [#allocation3], 40
    %1009 = vst.msk [vmem:[%s1008] sm:$0xff] %vm229, %v1006
    %s1010 = scalar_lea.vmem [#allocation2], 48
    %v1011 = vld [vmem:[%s1010] sm:$0xff]
    %v1012 = vsel %vm229, %v1006, 0
    %1014 = vmatprep.subr.mxu0 0.0
    %1015 = vmatpush1.msra.mxu0 0.0
    %1016 = vmatprep.subr.mxu0 0.0
    %1017 = vmatpush1.msra.mxu0 0.0
    %1018 = vmatprep.subr.mxu0 0.0
    %1019 = vmatpush1.msra.mxu0 0.0
    %1020 = vmatprep.subr.mxu0 0.0
    %1021 = vmatpush1.msra.mxu0 0.0
    %1022 = vmatprep.subr.mxu0 0.0
    %1023 = vmatpush1.msra.mxu0 0.0
    %1024 = vmatprep.subr.mxu0 0.0
    %1025 = vmatpush1.msra.mxu0 0.0
    %1026 = vmatprep.subr.mxu0 0.0
    %1027 = vmatpush1.msra.mxu0 0.0
    %1028 = vmatprep.subr.mxu0 0.0
    %1029 = vmatpush1.msra.mxu0 0.0
    %1030 = vmatprep.subr.mxu0 0.0
    %1031 = vmatpush1.msra.mxu0 0.0
    %1032 = vmatprep.subr.mxu0 0.0
    %1033 = vmatpush1.msra.mxu0 0.0
    %1034 = vmatprep.subr.mxu0 0.0
    %1035 = vmatpush1.msra.mxu0 0.0
    %1036 = vmatprep.subr.mxu0 0.0
    %1037 = vmatpush1.msra.mxu0 0.0
    %1038 = vmatprep.subr.mxu0 0.0
    %1039 = vmatpush1.msra.mxu0 %v370
    %1040 = vmatprep.subr.mxu0 0.0
    %1041 = vmatpush1.msra.mxu0 %v369
    %1042 = vmatprep.subr.mxu0 0.0
    %1043 = vmatpush1.msra.mxu0 %v368
    %1044 = vmatprep.subr.mxu0 0.0
    %1045 = vmatpush1.msra.mxu0 %v367
    %1046 = vmatprep.subr.mxu0 0.0
    %1047 = vmatpush2.msra.mxu0 0.0
    %1048 = vmatprep.subr.mxu0 0.0
    %1049 = vmatpush2.msra.mxu0 0.0
    %1050 = vmatprep.subr.mxu0 0.0
    %1051 = vmatpush2.msra.mxu0 0.0
    %1052 = vmatprep.subr.mxu0 0.0
    %1053 = vmatpush2.msra.mxu0 0.0
    %1054 = vmatprep.subr.mxu0 0.0
    %1055 = vmatpush2.msra.mxu0 0.0
    %1056 = vmatprep.subr.mxu0 0.0
    %1057 = vmatpush2.msra.mxu0 0.0
    %1058 = vmatprep.subr.mxu0 0.0
    %1059 = vmatpush2.msra.mxu0 0.0
    %1060 = vmatprep.subr.mxu0 0.0
    %1061 = vmatpush2.msra.mxu0 0.0
    %1062 = vmatprep.subr.mxu0 0.0
    %1063 = vmatpush2.msra.mxu0 0.0
    %1064 = vmatprep.subr.mxu0 0.0
    %1065 = vmatpush2.msra.mxu0 0.0
    %1066 = vmatprep.subr.mxu0 0.0
    %1067 = vmatpush2.msra.mxu0 0.0
    %1068 = vmatprep.subr.mxu0 0.0
    %1069 = vmatpush2.msra.mxu0 0.0
    %1070 = vmatprep.subr.mxu0 0.0
    %1071 = vmatpush2.msra.mxu0 0.0
    %1072 = vmatprep.subr.mxu0 0.0
    %1073 = vmatpush2.msra.mxu0 0.0
    %1074 = vmatprep.subr.mxu0 0.0
    %1075 = vmatpush2.msra.mxu0 0.0
    %1076 = vmatprep.subr.mxu0 0.0
    %1077 = vmatpush2.msra.mxu0 0.0
    %1078 = vmatprep.mubr.f32.mxu0 0.0
    %1079 = vmatmul.mubr.f32.gmra.mxu0 %v1012
    %v1080 = vpop.f32.mrf.mxu0
    %v1081 = vadd.f32 0.0, %v1080
    %v1082 = vpop.f32.mrf.mxu0
    %1083 = vdwg.mxu0
    %v1084 = vadd.f32 %v1011, %v1081
    %v1085 = vxor.u32 %v1084, 2147483648
    %v1086 = vmul.f32 %v1085, 1.442695
    %v1087 = vpow.pop %v1086
    %v1088 = vadd.f32 %v1087, 1.0
    %v1089 = vrcp.pop %v1088
    %v1090 = vmul.f32 1.0, %v1089
    %1092 = vrot.lane.b32.xlu0 %v1084, 32
    %v1093 = vpop.permute.xlu0 %1092
    %v1095 = vmul.f32 %v1090, %v1093
    %1097 = vrot.lane.b32.xlu0 %v1095, 64
    %v1098 = vpop.permute.xlu0 %1097
    %v1100 = vadd.f32 %v1084, %v1098
    %v1101 = vtanh.pop %v1100
    %v1102 = vsub.f32 1.0, %v1090
    %1104 = vrot.lane.b32.xlu0 %v1101, 96
    %v1105 = vpop.permute.xlu0 %1104
    %v1107 = vmul.f32 %v1102, %v1105
    %v1108 = vmul.f32 %v1090, %v1003
    %v1109 = vadd.f32 %v1107, %v1108
    %1111 = vrot.lane.b32.xlu0 %v1109, 96
    %v1112 = vpop.permute.xlu0 %1111
    %s1114 = scalar_lea.vmem [#allocation3], 48
    %1115 = vst.msk [vmem:[%s1114] sm:$0xff] %vm229, %v1112
    %s1116 = scalar_lea.vmem [#allocation2], 56
    %v1117 = vld [vmem:[%s1116] sm:$0xff]
    %v1118 = vsel %vm229, %v1112, 0
    %1120 = vmatprep.subr.mxu0 0.0
    %1121 = vmatpush1.msra.mxu0 0.0
    %1122 = vmatprep.subr.mxu0 0.0
    %1123 = vmatpush1.msra.mxu0 0.0
    %1124 = vmatprep.subr.mxu0 0.0
    %1125 = vmatpush1.msra.mxu0 0.0
    %1126 = vmatprep.subr.mxu0 0.0
    %1127 = vmatpush1.msra.mxu0 0.0
    %1128 = vmatprep.subr.mxu0 0.0
    %1129 = vmatpush1.msra.mxu0 0.0
    %1130 = vmatprep.subr.mxu0 0.0
    %1131 = vmatpush1.msra.mxu0 0.0
    %1132 = vmatprep.subr.mxu0 0.0
    %1133 = vmatpush1.msra.mxu0 0.0
    %1134 = vmatprep.subr.mxu0 0.0
    %1135 = vmatpush1.msra.mxu0 0.0
    %1136 = vmatprep.subr.mxu0 0.0
    %1137 = vmatpush1.msra.mxu0 0.0
    %1138 = vmatprep.subr.mxu0 0.0
    %1139 = vmatpush1.msra.mxu0 0.0
    %1140 = vmatprep.subr.mxu0 0.0
    %1141 = vmatpush1.msra.mxu0 0.0
    %1142 = vmatprep.subr.mxu0 0.0
    %1143 = vmatpush1.msra.mxu0 0.0
    %1144 = vmatprep.subr.mxu0 0.0
    %1145 = vmatpush1.msra.mxu0 %v370
    %1146 = vmatprep.subr.mxu0 0.0
    %1147 = vmatpush1.msra.mxu0 %v369
    %1148 = vmatprep.subr.mxu0 0.0
    %1149 = vmatpush1.msra.mxu0 %v368
    %1150 = vmatprep.subr.mxu0 0.0
    %1151 = vmatpush1.msra.mxu0 %v367
    %1152 = vmatprep.subr.mxu0 0.0
    %1153 = vmatpush2.msra.mxu0 0.0
    %1154 = vmatprep.subr.mxu0 0.0
    %1155 = vmatpush2.msra.mxu0 0.0
    %1156 = vmatprep.subr.mxu0 0.0
    %1157 = vmatpush2.msra.mxu0 0.0
    %1158 = vmatprep.subr.mxu0 0.0
    %1159 = vmatpush2.msra.mxu0 0.0
    %1160 = vmatprep.subr.mxu0 0.0
    %1161 = vmatpush2.msra.mxu0 0.0
    %1162 = vmatprep.subr.mxu0 0.0
    %1163 = vmatpush2.msra.mxu0 0.0
    %1164 = vmatprep.subr.mxu0 0.0
    %1165 = vmatpush2.msra.mxu0 0.0
    %1166 = vmatprep.subr.mxu0 0.0
    %1167 = vmatpush2.msra.mxu0 0.0
    %1168 = vmatprep.subr.mxu0 0.0
    %1169 = vmatpush2.msra.mxu0 0.0
    %1170 = vmatprep.subr.mxu0 0.0
    %1171 = vmatpush2.msra.mxu0 0.0
    %1172 = vmatprep.subr.mxu0 0.0
    %1173 = vmatpush2.msra.mxu0 0.0
    %1174 = vmatprep.subr.mxu0 0.0
    %1175 = vmatpush2.msra.mxu0 0.0
    %1176 = vmatprep.subr.mxu0 0.0
    %1177 = vmatpush2.msra.mxu0 0.0
    %1178 = vmatprep.subr.mxu0 0.0
    %1179 = vmatpush2.msra.mxu0 0.0
    %1180 = vmatprep.subr.mxu0 0.0
    %1181 = vmatpush2.msra.mxu0 0.0
    %1182 = vmatprep.subr.mxu0 0.0
    %1183 = vmatpush2.msra.mxu0 0.0
    %1184 = vmatprep.mubr.f32.mxu0 0.0
    %1185 = vmatmul.mubr.f32.gmra.mxu0 %v1118
    %v1186 = vpop.f32.mrf.mxu0
    %v1187 = vadd.f32 0.0, %v1186
    %v1188 = vpop.f32.mrf.mxu0
    %1189 = vdwg.mxu0
    %v1190 = vadd.f32 %v1117, %v1187
    %v1191 = vxor.u32 %v1190, 2147483648
    %v1192 = vmul.f32 %v1191, 1.442695
    %v1193 = vpow.pop %v1192
    %v1194 = vadd.f32 %v1193, 1.0
    %v1195 = vrcp.pop %v1194
    %v1196 = vmul.f32 1.0, %v1195
    %1198 = vrot.lane.b32.xlu0 %v1190, 32
    %v1199 = vpop.permute.xlu0 %1198
    %v1201 = vmul.f32 %v1196, %v1199
    %1203 = vrot.lane.b32.xlu0 %v1201, 64
    %v1204 = vpop.permute.xlu0 %1203
    %v1206 = vadd.f32 %v1190, %v1204
    %v1207 = vtanh.pop %v1206
    %v1208 = vsub.f32 1.0, %v1196
    %1210 = vrot.lane.b32.xlu0 %v1207, 96
    %v1211 = vpop.permute.xlu0 %1210
    %v1213 = vmul.f32 %v1208, %v1211
    %v1214 = vmul.f32 %v1196, %v1109
    %v1215 = vadd.f32 %v1213, %v1214
    %1217 = vrot.lane.b32.xlu0 %v1215, 96
    %v1218 = vpop.permute.xlu0 %1217
    %s1220 = scalar_lea.vmem [#allocation3], 56
    %1221 = vst.msk [vmem:[%s1220] sm:$0xff] %vm229, %v1218
    %v1222 = vld [vmem:[#allocation3] sm:$0xff]
    %v1223 = vld [vmem:[#allocation3 + $0x8] sm:$0xff]
    %v1224 = vld [vmem:[#allocation3 + $0x10] sm:$0xff]
    %v1225 = vld [vmem:[#allocation3 + $0x18] sm:$0xff]
    %v1226 = vld [vmem:[#allocation3 + $0x20] sm:$0xff]
    %v1227 = vld [vmem:[#allocation3 + $0x28] sm:$0xff]
    %v1228 = vld [vmem:[#allocation3 + $0x30] sm:$0xff]
    %v1229 = vld [vmem:[#allocation3 + $0x38] sm:$0xff]
    %v1230 = vld [vmem:[%s6] sm:$0xff]
    %v1231 = vld [vmem:[%s6 + $0x8] sm:$0xff]
    %v1232 = vld [vmem:[%s6 + $0x10] sm:$0xff]
    %v1233 = vld [vmem:[%s6 + $0x18] sm:$0xff]
    %v1234 = vld [vmem:[%s7] sm:$0x1]
    %v1236 = vlaneseq
    %v1237 = vshrl.u32 %v1236, 7
    %v1238 = vsub.s32 0, %v1237
    %v1239 = vrot.slane %v1234, %v1238
    %v1242 = vsel %vm229, %v1222, 0
    %v1245 = vsel %vm229, %v1223, 0
    %v1248 = vsel %vm229, %v1224, 0
    %v1251 = vsel %vm229, %v1225, 0
    %v1254 = vsel %vm229, %v1226, 0
    %v1257 = vsel %vm229, %v1227, 0
    %v1260 = vsel %vm229, %v1228, 0
    %v1263 = vsel %vm229, %v1229, 0
    %1265 = vmatprep.subr.mxu0 0.0
    %1266 = vmatpush1.msra.mxu0 0.0
    %1267 = vmatprep.subr.mxu0 0.0
    %1268 = vmatpush1.msra.mxu0 0.0
    %1269 = vmatprep.subr.mxu0 0.0
    %1270 = vmatpush1.msra.mxu0 0.0
    %1271 = vmatprep.subr.mxu0 0.0
    %1272 = vmatpush1.msra.mxu0 0.0
    %1273 = vmatprep.subr.mxu0 0.0
    %1274 = vmatpush1.msra.mxu0 0.0
    %1275 = vmatprep.subr.mxu0 0.0
    %1276 = vmatpush1.msra.mxu0 0.0
    %1277 = vmatprep.subr.mxu0 0.0
    %1278 = vmatpush1.msra.mxu0 0.0
    %1279 = vmatprep.subr.mxu0 0.0
    %1280 = vmatpush1.msra.mxu0 0.0
    %1281 = vmatprep.subr.mxu0 0.0
    %1282 = vmatpush1.msra.mxu0 0.0
    %1283 = vmatprep.subr.mxu0 0.0
    %1284 = vmatpush1.msra.mxu0 0.0
    %1285 = vmatprep.subr.mxu0 0.0
    %1286 = vmatpush1.msra.mxu0 0.0
    %1287 = vmatprep.subr.mxu0 0.0
    %1288 = vmatpush1.msra.mxu0 0.0
    %1289 = vmatprep.subr.mxu0 0.0
    %1290 = vmatpush1.msra.mxu0 %v1233
    %1291 = vmatprep.subr.mxu0 0.0
    %1292 = vmatpush1.msra.mxu0 %v1232
    %1293 = vmatprep.subr.mxu0 0.0
    %1294 = vmatpush1.msra.mxu0 %v1231
    %1295 = vmatprep.subr.mxu0 0.0
    %1296 = vmatpush1.msra.mxu0 %v1230
    %1297 = vmatprep.subr.mxu0 0.0
    %1298 = vmatpush2.msra.mxu0 0.0
    %1299 = vmatprep.subr.mxu0 0.0
    %1300 = vmatpush2.msra.mxu0 0.0
    %1301 = vmatprep.subr.mxu0 0.0
    %1302 = vmatpush2.msra.mxu0 0.0
    %1303 = vmatprep.subr.mxu0 0.0
    %1304 = vmatpush2.msra.mxu0 0.0
    %1305 = vmatprep.subr.mxu0 0.0
    %1306 = vmatpush2.msra.mxu0 0.0
    %1307 = vmatprep.subr.mxu0 0.0
    %1308 = vmatpush2.msra.mxu0 0.0
    %1309 = vmatprep.subr.mxu0 0.0
    %1310 = vmatpush2.msra.mxu0 0.0
    %1311 = vmatprep.subr.mxu0 0.0
    %1312 = vmatpush2.msra.mxu0 0.0
    %1313 = vmatprep.subr.mxu0 0.0
    %1314 = vmatpush2.msra.mxu0 0.0
    %1315 = vmatprep.subr.mxu0 0.0
    %1316 = vmatpush2.msra.mxu0 0.0
    %1317 = vmatprep.subr.mxu0 0.0
    %1318 = vmatpush2.msra.mxu0 0.0
    %1319 = vmatprep.subr.mxu0 0.0
    %1320 = vmatpush2.msra.mxu0 0.0
    %1321 = vmatprep.subr.mxu0 0.0
    %1322 = vmatpush2.msra.mxu0 0.0
    %1323 = vmatprep.subr.mxu0 0.0
    %1324 = vmatpush2.msra.mxu0 0.0
    %1325 = vmatprep.subr.mxu0 0.0
    %1326 = vmatpush2.msra.mxu0 0.0
    %1327 = vmatprep.subr.mxu0 0.0
    %1328 = vmatpush2.msra.mxu0 0.0
    %1329 = vmatprep.mubr.f32.mxu0 0.0
    %1330 = vmatmul.mubr.f32.gmra.mxu0 %v1242
    %v1331 = vpop.f32.mrf.mxu0
    %v1332 = vadd.f32 %v1239, %v1331
    %v1333 = vpop.f32.mrf.mxu0
    %1334 = vmatprep.mubr.f32.mxu0 0.0
    %1335 = vmatmul.mubr.f32.gmra.mxu0 %v1245
    %v1336 = vpop.f32.mrf.mxu0
    %v1337 = vadd.f32 %v1239, %v1336
    %v1338 = vpop.f32.mrf.mxu0
    %1339 = vmatprep.mubr.f32.mxu0 0.0
    %1340 = vmatmul.mubr.f32.gmra.mxu0 %v1248
    %v1341 = vpop.f32.mrf.mxu0
    %v1342 = vadd.f32 %v1239, %v1341
    %v1343 = vpop.f32.mrf.mxu0
    %1344 = vmatprep.mubr.f32.mxu0 0.0
    %1345 = vmatmul.mubr.f32.gmra.mxu0 %v1251
    %v1346 = vpop.f32.mrf.mxu0
    %v1347 = vadd.f32 %v1239, %v1346
    %v1348 = vpop.f32.mrf.mxu0
    %1349 = vmatprep.mubr.f32.mxu0 0.0
    %1350 = vmatmul.mubr.f32.gmra.mxu0 %v1254
    %v1351 = vpop.f32.mrf.mxu0
    %v1352 = vadd.f32 %v1239, %v1351
    %v1353 = vpop.f32.mrf.mxu0
    %1354 = vmatprep.mubr.f32.mxu0 0.0
    %1355 = vmatmul.mubr.f32.gmra.mxu0 %v1257
    %v1356 = vpop.f32.mrf.mxu0
    %v1357 = vadd.f32 %v1239, %v1356
    %v1358 = vpop.f32.mrf.mxu0
    %1359 = vmatprep.mubr.f32.mxu0 0.0
    %1360 = vmatmul.mubr.f32.gmra.mxu0 %v1260
    %v1361 = vpop.f32.mrf.mxu0
    %v1362 = vadd.f32 %v1239, %v1361
    %v1363 = vpop.f32.mrf.mxu0
    %1364 = vmatprep.mubr.f32.mxu0 0.0
    %1365 = vmatmul.mubr.f32.gmra.mxu0 %v1263
    %v1366 = vpop.f32.mrf.mxu0
    %v1367 = vadd.f32 %v1239, %v1366
    %v1368 = vpop.f32.mrf.mxu0
    %1369 = vdwg.mxu0
    %vm1370 = vcmask 31744
    %v1371 = vsel %vm1370, %v1332, -inf
    %1372 = vmax.xlane.f32.xlu0 %v1371
    %v1373 = vpop.xlane.xlu0 %1372
    %v1374 = vsel %vm1370, %v1337, -inf
    %1375 = vmax.xlane.f32.xlu0 %v1374
    %v1376 = vpop.xlane.xlu0 %1375
    %v1377 = vsel %vm1370, %v1342, -inf
    %1378 = vmax.xlane.f32.xlu0 %v1377
    %v1379 = vpop.xlane.xlu0 %1378
    %v1380 = vsel %vm1370, %v1347, -inf
    %1381 = vmax.xlane.f32.xlu0 %v1380
    %v1382 = vpop.xlane.xlu0 %1381
    %v1383 = vsel %vm1370, %v1352, -inf
    %1384 = vmax.xlane.f32.xlu0 %v1383
    %v1385 = vpop.xlane.xlu0 %1384
    %v1386 = vsel %vm1370, %v1357, -inf
    %1387 = vmax.xlane.f32.xlu0 %v1386
    %v1388 = vpop.xlane.xlu0 %1387
    %v1389 = vsel %vm1370, %v1362, -inf
    %1390 = vmax.xlane.f32.xlu0 %v1389
    %v1391 = vpop.xlane.xlu0 %1390
    %v1392 = vsel %vm1370, %v1367, -inf
    %1393 = vmax.xlane.f32.xlu0 %v1392
    %v1394 = vpop.xlane.xlu0 %1393
    %v1395 = vsub.f32 %v1332, %v1373
    %v1396 = vsub.f32 %v1337, %v1376
    %v1397 = vsub.f32 %v1342, %v1379
    %v1398 = vsub.f32 %v1347, %v1382
    %v1399 = vsub.f32 %v1352, %v1385
    %v1400 = vsub.f32 %v1357, %v1388
    %v1401 = vsub.f32 %v1362, %v1391
    %v1402 = vsub.f32 %v1367, %v1394
    %v1403 = vmul.f32 %v1395, 1.442695
    %v1404 = vpow.pop %v1403
    %v1405 = vmul.f32 %v1396, 1.442695
    %v1406 = vpow.pop %v1405
    %v1407 = vmul.f32 %v1397, 1.442695
    %v1408 = vpow.pop %v1407
    %v1409 = vmul.f32 %v1398, 1.442695
    %v1410 = vpow.pop %v1409
    %v1411 = vmul.f32 %v1399, 1.442695
    %v1412 = vpow.pop %v1411
    %v1413 = vmul.f32 %v1400, 1.442695
    %v1414 = vpow.pop %v1413
    %v1415 = vmul.f32 %v1401, 1.442695
    %v1416 = vpow.pop %v1415
    %v1417 = vmul.f32 %v1402, 1.442695
    %v1418 = vpow.pop %v1417
    %v1419 = vsel %vm1370, %v1404, 0.0
    %1420 = vadd.xlane.f32.xlu0 %v1419
    %v1421 = vpop.xlane.xlu0 %1420
    %v1422 = vsel %vm1370, %v1406, 0.0
    %1423 = vadd.xlane.f32.xlu0 %v1422
    %v1424 = vpop.xlane.xlu0 %1423
    %v1425 = vsel %vm1370, %v1408, 0.0
    %1426 = vadd.xlane.f32.xlu0 %v1425
    %v1427 = vpop.xlane.xlu0 %1426
    %v1428 = vsel %vm1370, %v1410, 0.0
    %1429 = vadd.xlane.f32.xlu0 %v1428
    %v1430 = vpop.xlane.xlu0 %1429
    %v1431 = vsel %vm1370, %v1412, 0.0
    %1432 = vadd.xlane.f32.xlu0 %v1431
    %v1433 = vpop.xlane.xlu0 %1432
    %v1434 = vsel %vm1370, %v1414, 0.0
    %1435 = vadd.xlane.f32.xlu0 %v1434
    %v1436 = vpop.xlane.xlu0 %1435
    %v1437 = vsel %vm1370, %v1416, 0.0
    %1438 = vadd.xlane.f32.xlu0 %v1437
    %v1439 = vpop.xlane.xlu0 %1438
    %v1440 = vsel %vm1370, %v1418, 0.0
    %1441 = vadd.xlane.f32.xlu0 %v1440
    %v1442 = vpop.xlane.xlu0 %1441
    %v1443 = vlog2.pop %v1421
    %v1444 = vmul.f32 %v1443, 0.6931472
    %v1445 = vlog2.pop %v1424
    %v1446 = vmul.f32 %v1445, 0.6931472
    %v1447 = vlog2.pop %v1427
    %v1448 = vmul.f32 %v1447, 0.6931472
    %v1449 = vlog2.pop %v1430
    %v1450 = vmul.f32 %v1449, 0.6931472
    %v1451 = vlog2.pop %v1433
    %v1452 = vmul.f32 %v1451, 0.6931472
    %v1453 = vlog2.pop %v1436
    %v1454 = vmul.f32 %v1453, 0.6931472
    %v1455 = vlog2.pop %v1439
    %v1456 = vmul.f32 %v1455, 0.6931472
    %v1457 = vlog2.pop %v1442
    %v1458 = vmul.f32 %v1457, 0.6931472
    %v1459 = vsub.f32 %v1395, %v1444
    %v1460 = vsub.f32 %v1396, %v1446
    %v1461 = vsub.f32 %v1397, %v1448
    %v1462 = vsub.f32 %v1398, %v1450
    %v1463 = vsub.f32 %v1399, %v1452
    %v1464 = vsub.f32 %v1400, %v1454
    %v1465 = vsub.f32 %v1401, %v1456
    %v1466 = vsub.f32 %v1402, %v1458
    %v1467 = vsel %vm1370, %v1459, 0.0
    %1468 = vadd.xlane.f32.xlu0 %v1467
    %v1469 = vpop.xlane.xlu0 %1468
    %v1470 = vsel %vm1370, %v1460, 0.0
    %1471 = vadd.xlane.f32.xlu0 %v1470
    %v1472 = vpop.xlane.xlu0 %1471
    %v1473 = vsel %vm1370, %v1461, 0.0
    %1474 = vadd.xlane.f32.xlu0 %v1473
    %v1475 = vpop.xlane.xlu0 %1474
    %v1476 = vsel %vm1370, %v1462, 0.0
    %1477 = vadd.xlane.f32.xlu0 %v1476
    %v1478 = vpop.xlane.xlu0 %1477
    %v1479 = vsel %vm1370, %v1463, 0.0
    %1480 = vadd.xlane.f32.xlu0 %v1479
    %v1481 = vpop.xlane.xlu0 %1480
    %v1482 = vsel %vm1370, %v1464, 0.0
    %1483 = vadd.xlane.f32.xlu0 %v1482
    %v1484 = vpop.xlane.xlu0 %1483
    %v1485 = vsel %vm1370, %v1465, 0.0
    %1486 = vadd.xlane.f32.xlu0 %v1485
    %v1487 = vpop.xlane.xlu0 %1486
    %v1488 = vsel %vm1370, %v1466, 0.0
    %1489 = vadd.xlane.f32.xlu0 %v1488
    %v1490 = vpop.xlane.xlu0 %1489
    %v1491 = vsub.f32 0.0, %v1469
    %v1492 = vsub.f32 0.0, %v1472
    %v1493 = vsub.f32 0.0, %v1475
    %v1494 = vsub.f32 0.0, %v1478
    %v1495 = vsub.f32 0.0, %v1481
    %v1496 = vsub.f32 0.0, %v1484
    %v1497 = vsub.f32 0.0, %v1487
    %v1498 = vsub.f32 0.0, %v1490
    %v1499 = vmul.f32 %v1491, 0.25
    %v1500 = vmul.f32 %v1492, 0.25
    %v1501 = vmul.f32 %v1493, 0.25
    %v1502 = vmul.f32 %v1494, 0.25
    %v1503 = vmul.f32 %v1495, 0.25
    %v1504 = vmul.f32 %v1496, 0.25
    %v1505 = vmul.f32 %v1497, 0.25
    %v1506 = vmul.f32 %v1498, 0.25
    %1507 = vrot.lane.b32.xlu0 %v70, 119
    %v1508 = vpop.permute.xlu0 %1507
    %1509 = vrot.lane.b32.xlu0 %v71, 119
    %v1510 = vpop.permute.xlu0 %1509
    %1511 = vrot.lane.b32.xlu0 %v72, 119
    %v1512 = vpop.permute.xlu0 %1511
    %1513 = vrot.lane.b32.xlu0 %v73, 119
    %v1514 = vpop.permute.xlu0 %1513
    %1515 = vrot.lane.b32.xlu0 %v74, 119
    %v1516 = vpop.permute.xlu0 %1515
    %1517 = vrot.lane.b32.xlu0 %v75, 119
    %v1518 = vpop.permute.xlu0 %1517
    %1519 = vrot.lane.b32.xlu0 %v76, 119
    %v1520 = vpop.permute.xlu0 %1519
    %1521 = vrot.lane.b32.xlu0 %v77, 119
    %v1522 = vpop.permute.xlu0 %1521
    %v1531 = vadd.f32 %v1332, %v1508
    %v1532 = vadd.f32 %v1337, %v1510
    %v1533 = vadd.f32 %v1342, %v1512
    %v1534 = vadd.f32 %v1347, %v1514
    %v1535 = vadd.f32 %v1352, %v1516
    %v1536 = vadd.f32 %v1357, %v1518
    %v1537 = vadd.f32 %v1362, %v1520
    %v1538 = vadd.f32 %v1367, %v1522
    %v1539 = vsel %vm1370, %v1531, -inf
    %1540 = vmax.xlane.f32.xlu0 %v1539
    %v1541 = vpop.xlane.xlu0 %1540
    %v1542 = vsel %vm1370, %v1532, -inf
    %1543 = vmax.xlane.f32.xlu0 %v1542
    %v1544 = vpop.xlane.xlu0 %1543
    %v1545 = vsel %vm1370, %v1533, -inf
    %1546 = vmax.xlane.f32.xlu0 %v1545
    %v1547 = vpop.xlane.xlu0 %1546
    %v1548 = vsel %vm1370, %v1534, -inf
    %1549 = vmax.xlane.f32.xlu0 %v1548
    %v1550 = vpop.xlane.xlu0 %1549
    %v1551 = vsel %vm1370, %v1535, -inf
    %1552 = vmax.xlane.f32.xlu0 %v1551
    %v1553 = vpop.xlane.xlu0 %1552
    %v1554 = vsel %vm1370, %v1536, -inf
    %1555 = vmax.xlane.f32.xlu0 %v1554
    %v1556 = vpop.xlane.xlu0 %1555
    %v1557 = vsel %vm1370, %v1537, -inf
    %1558 = vmax.xlane.f32.xlu0 %v1557
    %v1559 = vpop.xlane.xlu0 %1558
    %v1560 = vsel %vm1370, %v1538, -inf
    %1561 = vmax.xlane.f32.xlu0 %v1560
    %v1562 = vpop.xlane.xlu0 %1561
    %v1563 = vlaneseq
    %v1564 = vand.u32 %v1563, 127
    %vm1565 = vcmp.ge.f32.partialorder %v1531, %v1541
    %vm1566 = vcmp.ge.f32.partialorder %v1532, %v1544
    %vm1567 = vcmp.ge.f32.partialorder %v1533, %v1547
    %vm1568 = vcmp.ge.f32.partialorder %v1534, %v1550
    %vm1569 = vcmp.ge.f32.partialorder %v1535, %v1553
    %vm1570 = vcmp.ge.f32.partialorder %v1536, %v1556
    %vm1571 = vcmp.ge.f32.partialorder %v1537, %v1559
    %vm1572 = vcmp.ge.f32.partialorder %v1538, %v1562
    %v1573 = vsel %vm1565, %v1564, 4
    %v1574 = vsel %vm1566, %v1564, 4
    %v1575 = vsel %vm1567, %v1564, 4
    %v1576 = vsel %vm1568, %v1564, 4
    %v1577 = vsel %vm1569, %v1564, 4
    %v1578 = vsel %vm1570, %v1564, 4
    %v1579 = vsel %vm1571, %v1564, 4
    %v1580 = vsel %vm1572, %v1564, 4
    %v1581 = vsel %vm1370, %v1573, 2147483647
    %v1582 = vand.u32 %v1581, 65535
    %v1583 = vshra.s32 %v1581, 16
    %v1584 = vcvt.s32.f32 %v1582
    %v1585 = vcvt.s32.f32 %v1583
    %1586 = vmin.xlane.f32.xlu0 %v1585
    %v1587 = vpop.xlane.xlu0 %1586
    %vm1588 = vcmp.eq.f32.partialorder %v1585, %v1587
    %v1589 = vsel %vm1588, %v1584, inf
    %1590 = vmin.xlane.f32.xlu0 %v1589
    %v1591 = vpop.xlane.xlu0 %1590
    %v1592 = vcvt.f32.s32 %v1591
    %v1593 = vcvt.f32.s32 %v1587
    %v1594 = vshll.u32 %v1593, 16
    %v1595 = vadd.s32 %v1594, %v1592
    %v1596 = vsel %vm1370, %v1574, 2147483647
    %v1597 = vand.u32 %v1596, 65535
    %v1598 = vshra.s32 %v1596, 16
    %v1599 = vcvt.s32.f32 %v1597
    %v1600 = vcvt.s32.f32 %v1598
    %1601 = vmin.xlane.f32.xlu0 %v1600
    %v1602 = vpop.xlane.xlu0 %1601
    %vm1603 = vcmp.eq.f32.partialorder %v1600, %v1602
    %v1604 = vsel %vm1603, %v1599, inf
    %1605 = vmin.xlane.f32.xlu0 %v1604
    %v1606 = vpop.xlane.xlu0 %1605
    %v1607 = vcvt.f32.s32 %v1606
    %v1608 = vcvt.f32.s32 %v1602
    %v1609 = vshll.u32 %v1608, 16
    %v1610 = vadd.s32 %v1609, %v1607
    %v1611 = vsel %vm1370, %v1575, 2147483647
    %v1612 = vand.u32 %v1611, 65535
    %v1613 = vshra.s32 %v1611, 16
    %v1614 = vcvt.s32.f32 %v1612
    %v1615 = vcvt.s32.f32 %v1613
    %1616 = vmin.xlane.f32.xlu0 %v1615
    %v1617 = vpop.xlane.xlu0 %1616
    %vm1618 = vcmp.eq.f32.partialorder %v1615, %v1617
    %v1619 = vsel %vm1618, %v1614, inf
    %1620 = vmin.xlane.f32.xlu0 %v1619
    %v1621 = vpop.xlane.xlu0 %1620
    %v1622 = vcvt.f32.s32 %v1621
    %v1623 = vcvt.f32.s32 %v1617
    %v1624 = vshll.u32 %v1623, 16
    %v1625 = vadd.s32 %v1624, %v1622
    %v1626 = vsel %vm1370, %v1576, 2147483647
    %v1627 = vand.u32 %v1626, 65535
    %v1628 = vshra.s32 %v1626, 16
    %v1629 = vcvt.s32.f32 %v1627
    %v1630 = vcvt.s32.f32 %v1628
    %1631 = vmin.xlane.f32.xlu0 %v1630
    %v1632 = vpop.xlane.xlu0 %1631
    %vm1633 = vcmp.eq.f32.partialorder %v1630, %v1632
    %v1634 = vsel %vm1633, %v1629, inf
    %1635 = vmin.xlane.f32.xlu0 %v1634
    %v1636 = vpop.xlane.xlu0 %1635
    %v1637 = vcvt.f32.s32 %v1636
    %v1638 = vcvt.f32.s32 %v1632
    %v1639 = vshll.u32 %v1638, 16
    %v1640 = vadd.s32 %v1639, %v1637
    %v1641 = vsel %vm1370, %v1577, 2147483647
    %v1642 = vand.u32 %v1641, 65535
    %v1643 = vshra.s32 %v1641, 16
    %v1644 = vcvt.s32.f32 %v1642
    %v1645 = vcvt.s32.f32 %v1643
    %1646 = vmin.xlane.f32.xlu0 %v1645
    %v1647 = vpop.xlane.xlu0 %1646
    %vm1648 = vcmp.eq.f32.partialorder %v1645, %v1647
    %v1649 = vsel %vm1648, %v1644, inf
    %1650 = vmin.xlane.f32.xlu0 %v1649
    %v1651 = vpop.xlane.xlu0 %1650
    %v1652 = vcvt.f32.s32 %v1651
    %v1653 = vcvt.f32.s32 %v1647
    %v1654 = vshll.u32 %v1653, 16
    %v1655 = vadd.s32 %v1654, %v1652
    %v1656 = vsel %vm1370, %v1578, 2147483647
    %v1657 = vand.u32 %v1656, 65535
    %v1658 = vshra.s32 %v1656, 16
    %v1659 = vcvt.s32.f32 %v1657
    %v1660 = vcvt.s32.f32 %v1658
    %1661 = vmin.xlane.f32.xlu0 %v1660
    %v1662 = vpop.xlane.xlu0 %1661
    %vm1663 = vcmp.eq.f32.partialorder %v1660, %v1662
    %v1664 = vsel %vm1663, %v1659, inf
    %1665 = vmin.xlane.f32.xlu0 %v1664
    %v1666 = vpop.xlane.xlu0 %1665
    %v1667 = vcvt.f32.s32 %v1666
    %v1668 = vcvt.f32.s32 %v1662
    %v1669 = vshll.u32 %v1668, 16
    %v1670 = vadd.s32 %v1669, %v1667
    %v1671 = vsel %vm1370, %v1579, 2147483647
    %v1672 = vand.u32 %v1671, 65535
    %v1673 = vshra.s32 %v1671, 16
    %v1674 = vcvt.s32.f32 %v1672
    %v1675 = vcvt.s32.f32 %v1673
    %1676 = vmin.xlane.f32.xlu0 %v1675
    %v1677 = vpop.xlane.xlu0 %1676
    %vm1678 = vcmp.eq.f32.partialorder %v1675, %v1677
    %v1679 = vsel %vm1678, %v1674, inf
    %1680 = vmin.xlane.f32.xlu0 %v1679
    %v1681 = vpop.xlane.xlu0 %1680
    %v1682 = vcvt.f32.s32 %v1681
    %v1683 = vcvt.f32.s32 %v1677
    %v1684 = vshll.u32 %v1683, 16
    %v1685 = vadd.s32 %v1684, %v1682
    %v1686 = vsel %vm1370, %v1580, 2147483647
    %v1687 = vand.u32 %v1686, 65535
    %v1688 = vshra.s32 %v1686, 16
    %v1689 = vcvt.s32.f32 %v1687
    %v1690 = vcvt.s32.f32 %v1688
    %1691 = vmin.xlane.f32.xlu0 %v1690
    %v1692 = vpop.xlane.xlu0 %1691
    %vm1693 = vcmp.eq.f32.partialorder %v1690, %v1692
    %v1694 = vsel %vm1693, %v1689, inf
    %1695 = vmin.xlane.f32.xlu0 %v1694
    %v1696 = vpop.xlane.xlu0 %1695
    %v1697 = vcvt.f32.s32 %v1696
    %v1698 = vcvt.f32.s32 %v1692
    %v1699 = vshll.u32 %v1698, 16
    %v1700 = vadd.s32 %v1699, %v1697
    %vm1701 = vcmp.eq.s32.totalorder %v1564, %v1595
    %vm1702 = vcmp.eq.s32.totalorder %v1564, %v1610
    %vm1703 = vcmp.eq.s32.totalorder %v1564, %v1625
    %vm1704 = vcmp.eq.s32.totalorder %v1564, %v1640
    %vm1705 = vcmp.eq.s32.totalorder %v1564, %v1655
    %vm1706 = vcmp.eq.s32.totalorder %v1564, %v1670
    %vm1707 = vcmp.eq.s32.totalorder %v1564, %v1685
    %vm1708 = vcmp.eq.s32.totalorder %v1564, %v1700
    %v1709 = vsel %vm1701, %v1459, 0.0
    %v1710 = vsel %vm1702, %v1460, 0.0
    %v1711 = vsel %vm1703, %v1461, 0.0
    %v1712 = vsel %vm1704, %v1462, 0.0
    %v1713 = vsel %vm1705, %v1463, 0.0
    %v1714 = vsel %vm1706, %v1464, 0.0
    %v1715 = vsel %vm1707, %v1465, 0.0
    %v1716 = vsel %vm1708, %v1466, 0.0
    %v1717 = vsel %vm1370, %v1709, 0.0
    %1718 = vadd.xlane.f32.xlu0 %v1717
    %v1719 = vpop.xlane.xlu0 %1718
    %v1720 = vsel %vm1370, %v1710, 0.0
    %1721 = vadd.xlane.f32.xlu0 %v1720
    %v1722 = vpop.xlane.xlu0 %1721
    %v1723 = vsel %vm1370, %v1711, 0.0
    %1724 = vadd.xlane.f32.xlu0 %v1723
    %v1725 = vpop.xlane.xlu0 %1724
    %v1726 = vsel %vm1370, %v1712, 0.0
    %1727 = vadd.xlane.f32.xlu0 %v1726
    %v1728 = vpop.xlane.xlu0 %1727
    %v1729 = vsel %vm1370, %v1713, 0.0
    %1730 = vadd.xlane.f32.xlu0 %v1729
    %v1731 = vpop.xlane.xlu0 %1730
    %v1732 = vsel %vm1370, %v1714, 0.0
    %1733 = vadd.xlane.f32.xlu0 %v1732
    %v1734 = vpop.xlane.xlu0 %1733
    %v1735 = vsel %vm1370, %v1715, 0.0
    %1736 = vadd.xlane.f32.xlu0 %v1735
    %v1737 = vpop.xlane.xlu0 %1736
    %v1738 = vsel %vm1370, %v1716, 0.0
    %1739 = vadd.xlane.f32.xlu0 %v1738
    %v1740 = vpop.xlane.xlu0 %1739
    %vm1741 = vcmp.eq.s32.totalorder %v1564, 32
    %v1742 = vcvt.s32.f32 %v1595
    %v1743 = vcvt.s32.f32 %v1610
    %v1744 = vcvt.s32.f32 %v1625
    %v1745 = vcvt.s32.f32 %v1640
    %v1746 = vcvt.s32.f32 %v1655
    %v1747 = vcvt.s32.f32 %v1670
    %v1748 = vcvt.s32.f32 %v1685
    %v1749 = vcvt.s32.f32 %v1700
    %v1750 = vsel %vm1741, %v1742, 0.0
    %v1751 = vsel %vm1741, %v1743, 0.0
    %v1752 = vsel %vm1741, %v1744, 0.0
    %v1753 = vsel %vm1741, %v1745, 0.0
    %v1754 = vsel %vm1741, %v1746, 0.0
    %v1755 = vsel %vm1741, %v1747, 0.0
    %v1756 = vsel %vm1741, %v1748, 0.0
    %v1757 = vsel %vm1741, %v1749, 0.0
    %vm1758 = vcmp.eq.s32.totalorder %v1564, 33
    %v1759 = vsel %vm1758, %v1719, 0.0
    %v1760 = vsel %vm1758, %v1722, 0.0
    %v1761 = vsel %vm1758, %v1725, 0.0
    %v1762 = vsel %vm1758, %v1728, 0.0
    %v1763 = vsel %vm1758, %v1731, 0.0
    %v1764 = vsel %vm1758, %v1734, 0.0
    %v1765 = vsel %vm1758, %v1737, 0.0
    %v1766 = vsel %vm1758, %v1740, 0.0
    %v1767 = vadd.f32 %v1750, %v1759
    %v1768 = vadd.f32 %v1751, %v1760
    %v1769 = vadd.f32 %v1752, %v1761
    %v1770 = vadd.f32 %v1753, %v1762
    %v1771 = vadd.f32 %v1754, %v1763
    %v1772 = vadd.f32 %v1755, %v1764
    %v1773 = vadd.f32 %v1756, %v1765
    %v1774 = vadd.f32 %v1757, %v1766
    %vm1775 = vcmp.eq.s32.totalorder %v1564, 34
    %1777 = vset.pattern.permute.xlu0 4
    %1778 = vperm.xlu0 %1777, %v1332
    %v1779 = vpop.permute.xlu0 %1778
    %1782 = vset.pattern.permute.xlu0 4
    %1783 = vperm.xlu0 %1782, %v1337
    %v1784 = vpop.permute.xlu0 %1783
    %1787 = vset.pattern.permute.xlu0 4
    %1788 = vperm.xlu0 %1787, %v1342
    %v1789 = vpop.permute.xlu0 %1788
    %1792 = vset.pattern.permute.xlu0 4
    %1793 = vperm.xlu0 %1792, %v1347
    %v1794 = vpop.permute.xlu0 %1793
    %1797 = vset.pattern.permute.xlu0 4
    %1798 = vperm.xlu0 %1797, %v1352
    %v1799 = vpop.permute.xlu0 %1798
    %1802 = vset.pattern.permute.xlu0 4
    %1803 = vperm.xlu0 %1802, %v1357
    %v1804 = vpop.permute.xlu0 %1803
    %1807 = vset.pattern.permute.xlu0 4
    %1808 = vperm.xlu0 %1807, %v1362
    %v1809 = vpop.permute.xlu0 %1808
    %1812 = vset.pattern.permute.xlu0 4
    %1813 = vperm.xlu0 %1812, %v1367
    %v1814 = vpop.permute.xlu0 %1813
    %v1816 = vsel %vm1775, %v1779, 0.0
    %v1817 = vsel %vm1775, %v1784, 0.0
    %v1818 = vsel %vm1775, %v1789, 0.0
    %v1819 = vsel %vm1775, %v1794, 0.0
    %v1820 = vsel %vm1775, %v1799, 0.0
    %v1821 = vsel %vm1775, %v1804, 0.0
    %v1822 = vsel %vm1775, %v1809, 0.0
    %v1823 = vsel %vm1775, %v1814, 0.0
    %v1824 = vadd.f32 %v1767, %v1816
    %v1825 = vadd.f32 %v1768, %v1817
    %v1826 = vadd.f32 %v1769, %v1818
    %v1827 = vadd.f32 %v1770, %v1819
    %v1828 = vadd.f32 %v1771, %v1820
    %v1829 = vadd.f32 %v1772, %v1821
    %v1830 = vadd.f32 %v1773, %v1822
    %v1831 = vadd.f32 %v1774, %v1823
    %vm1832 = vcmp.eq.s32.totalorder %v1564, 35
    %v1833 = vsel %vm1832, %v1499, 0.0
    %v1834 = vsel %vm1832, %v1500, 0.0
    %v1835 = vsel %vm1832, %v1501, 0.0
    %v1836 = vsel %vm1832, %v1502, 0.0
    %v1837 = vsel %vm1832, %v1503, 0.0
    %v1838 = vsel %vm1832, %v1504, 0.0
    %v1839 = vsel %vm1832, %v1505, 0.0
    %v1840 = vsel %vm1832, %v1506, 0.0
    %v1841 = vadd.f32 %v1824, %v1833
    %v1842 = vadd.f32 %v1825, %v1834
    %v1843 = vadd.f32 %v1826, %v1835
    %v1844 = vadd.f32 %v1827, %v1836
    %v1845 = vadd.f32 %v1828, %v1837
    %v1846 = vadd.f32 %v1829, %v1838
    %v1847 = vadd.f32 %v1830, %v1839
    %v1848 = vadd.f32 %v1831, %v1840
    %v1849 = vsel %vm229, %v1222, %v1841
    %v1850 = vsel %vm229, %v1223, %v1842
    %v1851 = vsel %vm229, %v1224, %v1843
    %v1852 = vsel %vm229, %v1225, %v1844
    %v1853 = vsel %vm229, %v1226, %v1845
    %v1854 = vsel %vm229, %v1227, %v1846
    %v1855 = vsel %vm229, %v1228, %v1847
    %v1856 = vsel %vm229, %v1229, %v1848
    %1857 = vst [vmem:[%s8] sm:$0xff] %v1849
    %1858 = vst [vmem:[%s8 + $0x8] sm:$0xff] %v1850
    %1859 = vst [vmem:[%s8 + $0x10] sm:$0xff] %v1851
    %1860 = vst [vmem:[%s8 + $0x18] sm:$0xff] %v1852
    %1861 = vst [vmem:[%s8 + $0x20] sm:$0xff] %v1853
    %1862 = vst [vmem:[%s8 + $0x28] sm:$0xff] %v1854
    %1863 = vst [vmem:[%s8 + $0x30] sm:$0xff] %v1855
    %1864 = vst [vmem:[%s8 + $0x38] sm:$0xff] %v1856
    // Predicated region
    $region46: #{a2c_rollout.1} parent=1 // pred_check
      _
    $region47: #{a2c_rollout.1} parent=1 // pred_check_branch
      %1866 = sbr.rel (0) target = $region49
    $region48: #{a2c_rollout.1} parent=1 // pred_region
      _
    $region49: #{a2c_rollout.1} parent=1 // pred_fallthru
      _
    // Predicated region
    $region50: #{a2c_rollout.1} parent=1 // pred_check
      _
    $region51: #{a2c_rollout.1} parent=1 // pred_check_branch
      %1868 = sbr.rel (0) target = $region53
    $region52: #{a2c_rollout.1} parent=1 // pred_region
      _
    $region53: #{a2c_rollout.1} parent=1 // pred_fallthru
      _
    %1869 = vsyncpa [#allocation5], 1
    %1870 = vsyncpa [#allocation7], 1

</llo_original>
